<compile_context>
chip_gen: v5e
topology: v5e:2x2
jax: 0.10.0
libtpu: 0.0.40
codegen_flags: <defaults>
</compile_context>

<pallas_src>
import functools
import math

import numpy as np

import jax
import jax.numpy as jnp
from jax.experimental import pallas as pl
from jax.experimental.pallas import tpu as pltpu  # noqa: F401  (TPU backend assumed)

F32 = jnp.float32


# ---------------------------------------------------------------------------
# In-kernel math helpers
# ---------------------------------------------------------------------------
def _erf_approx(x):
    # Abramowitz & Stegun 7.1.26, |err| < 1.5e-7 (matches torch's exact-erf GELU
    # to f32 precision).  exp() rides the otherwise-idle EUP slot.
    p = 0.3275911
    a1, a2, a3, a4, a5 = 0.254829592, -0.284496736, 1.421413741, -1.453152027, 1.061405429
    ax = jnp.abs(x)
    t = 1.0 / (1.0 + p * ax)
    poly = ((((a5 * t + a4) * t + a3) * t + a2) * t + a1) * t
    y = 1.0 - poly * jnp.exp(-ax * ax)
    return jnp.where(x >= 0, y, -y)


def _gelu(x):  # exact-erf GELU (torch nn.GELU() default), via the approx above
    return 0.5 * x * (1.0 + _erf_approx(x * 0.7071067811865476))


# ---------------------------------------------------------------------------
# Fused Pallas kernel
# ---------------------------------------------------------------------------
def fcvae_fused_kernel(x_ref, rand_ref, wA_ref, wB_ref, b_ref, o_ref, *, meta):
    d = meta["dims"]
    D, G, H1, H2 = d["D"], d["G"], d["H1"], d["H2"]
    NH2, NH8 = d["NH2"], d["NH8"]
    GH, HH = G * H1, H1 * H1
    GHH = G * HH
    offA, offB, boff = meta["offA"], meta["offB"], meta["boff"]

    def wA(name):
        k, lo, hi = offA[name]
        return wA_ref[:k, lo:hi]

    def wB(name):
        k, lo, hi = offB[name]
        return wB_ref[:k, lo:hi]

    def bias(name):
        lo, hi = boff[name]
        return b_ref[:, lo:hi]

    dot = functools.partial(jnp.dot, preferred_element_type=F32)

    x = x_ref[...]                                   # (B, D)
    drop = rand_ref[:, 0:H2]                         # scaled dropout mask
    eps1 = rand_ref[:, H2:H2 + NH8]
    eps2 = rand_ref[:, H2 + NH8:H2 + NH8 + D]

    # ---- stage 1: shared-LHS matmul on x: [LFM dense(+perm) | GFM dense | enc1 x-part]
    x1 = dot(x, wA("x1")) + bias("x1")
    L = x1[:, 0:GH]                                  # a3 flattened (g-major, h-minor)
    gf_pre = x1[:, GH:GH + H2]
    e1x = x1[:, GH + H2:GH + H2 + NH2]               # already includes be1

    # GFM: ReLU then (training-mode) Dropout(p=0.1)
    gf = jnp.maximum(gf_pre, 0.0) * drop             # (B, H2)

    # ---- LFM attention, all 2-D lane-dense ---------------------------------
    kqv = dot(L, wA("kqv")) + bias("kqv")            # (B, 3*GHH)
    krep = kqv[:, 0:GHH]                             # cols (g,i,j): scale*k[b,g,i]
    qrep = kqv[:, GHH:2 * GHH]                       # cols (g,i,j): q[b,g,j]
    vrep = kqv[:, 2 * GHH:3 * GHH]                   # cols (i,g,j): v[b,g,i]

    # scores s[b,i,j] = scale * sum_g k[b,g,i]*q[b,g,j]   (lane layout (i,j))
    prod = krep * qrep
    s2 = prod[:, 0:HH]
    for g in range(1, G):
        s2 = s2 + prod[:, g * HH:(g + 1) * HH]

    # softmax over torch dim=1 (i), per (b, j)
    trep = wB("trep")                                # (H1, HH): v[j] -> cols (i,j)
    mj = s2[:, 0:H1]
    for i in range(1, H1):
        mj = jnp.maximum(mj, s2[:, i * H1:(i + 1) * H1])
    e2 = jnp.exp(s2 - dot(mj, trep))
    den = e2[:, 0:H1]
    for i in range(1, H1):
        den = den + e2[:, i * H1:(i + 1) * H1]
    w2 = e2 / dot(den, trep)                         # (B, HH) cols (i,j)

    # out[b,g,j] = sum_i v[b,g,i] * w2[b,i,j]
    wrep = dot(w2, wA("tg"))                         # (B, H1*GH) cols (i,g,j): w2[b,i,j]
    pv = vrep * wrep
    o_attn = pv[:, 0:GH]
    for i in range(1, H1):
        o_attn = o_attn + pv[:, i * GH:(i + 1) * GH]  # (B, GH) cols (g,j)

    lf = jnp.maximum(dot(o_attn, wA("ffd")) + bias("ffd"), 0.0)   # (B, H2)

    # ---- VAE encoder (cat(x, gf, lf) folded into split weights) ------------
    h = _gelu(e1x + dot(gf, wB("we1g")) + dot(lf, wB("we1l")))
    h = _gelu(dot(h, wB("we2")) + bias("be2"))
    ml = dot(h, wB("wml")) + bias("bml")             # [z_mean | z_logvar]
    z_mean = ml[:, 0:NH8]
    z_logvar = ml[:, NH8:2 * NH8]
    z = eps1 * jnp.exp(0.5 * z_logvar) + z_mean

    # ---- VAE decoder (cat(z, gf, lf) folded into split weights) ------------
    h = _gelu(dot(z, wB("wd1z")) + dot(gf, wB("wd1g")) + dot(lf, wB("wd1l"))
              + bias("bd1"))
    h = _gelu(dot(h, wB("wd2")) + bias("bd2"))
    rml = dot(h, wB("wrml")) + bias("brml")          # [recon_mean | recon_logvar], 2*D lanes
    mean = rml[:, 0:D]
    logvar = rml[:, D:2 * D]
    o_ref[...] = eps2 * jnp.exp(0.5 * logvar) + mean


# ---------------------------------------------------------------------------
# Parameter init (deterministic, PyTorch nn.Linear-style uniform)
# ---------------------------------------------------------------------------
def _init_linear(key, fan_in, fan_out):
    k = 1.0 / math.sqrt(fan_in)
    kw, kb = jax.random.split(key)
    w = jax.random.uniform(kw, (fan_out, fan_in), F32, -k, k)
    b = jax.random.uniform(kb, (fan_out,), F32, -k, k)
    return w, b


def init_params(key, n_dim, n_hid1, n_hid2, n_seq):
    g = n_dim // n_seq
    n_hid = n_hid2 * 2 + n_dim
    shapes = {
        "gfm_dense": (n_dim, n_hid2),
        "lfm_dense": (n_seq, n_hid1),
        "attn_k": (n_hid1, n_hid1),
        "attn_q": (n_hid1, n_hid1),
        "attn_v": (n_hid1, n_hid1),
        "lfm_ffd": (g * n_hid1, n_hid2),
        "enc1": (n_hid, n_hid // 2),
        "enc2": (n_hid // 2, n_hid // 4),
        "z_mean": (n_hid // 4, n_hid // 8),
        "z_logvar": (n_hid // 4, n_hid // 8),
        "dec1": (n_hid // 8 + 2 * n_hid2, n_hid // 4),
        "dec2": (n_hid // 4, n_hid // 2),
        "recon_mean": (n_hid // 2, n_dim),
        "recon_logvar": (n_hid // 2, n_dim),
    }
    params = {}
    for k, (name, (fi, fo)) in zip(jax.random.split(key, len(shapes)), shapes.items()):
        params[name] = _init_linear(k, fi, fo)
    return params


# ---------------------------------------------------------------------------
# One-time weight preparation: DFT folding, permute folding, rep-expansions,
# column packing and slab consolidation.
# ---------------------------------------------------------------------------
def _pack_cols(entries):
    max_k = max(a.shape[0] for _, a in entries)
    total = sum(a.shape[1] for _, a in entries)
    slab = np.zeros((max_k, total), np.float32)
    off, lo = {}, 0
    for name, a in entries:
        k, n = a.shape
        slab[:k, lo:lo + n] = a
        off[name] = (k, lo, lo + n)
        lo += n
    return slab, off


def _pack_bias(entries):
    total = sum(a.shape[0] for _, a in entries)
    row = np.zeros((1, total), np.float32)
    off, lo = {}, 0
    for name, a in entries:
        n = a.shape[0]
        row[0, lo:lo + n] = a
        off[name] = (lo, lo + n)
        lo += n
    return row, off


def prepare_params(params, n_dim, n_hid1, n_hid2, n_seq):
    D, H1, H2, S = n_dim, n_hid1, n_hid2, n_seq
    G = D // S
    GH, HH = G * H1, H1 * H1
    NH = 2 * H2 + D
    NH2, NH4, NH8 = NH // 2, NH // 4, NH // 8
    scale = float(H1) ** (-0.5)

    def npf(a):
        return np.asarray(a, dtype=np.float32)

    wg, bg = map(npf, params["gfm_dense"])
    wd, bd = map(npf, params["lfm_dense"])
    wk, bk = map(npf, params["attn_k"])
    wq, bq = map(npf, params["attn_q"])
    wv, bv = map(npf, params["attn_v"])
    wf, bf = map(npf, params["lfm_ffd"])
    we1, be1 = map(npf, params["enc1"])
    we2, be2 = map(npf, params["enc2"])
    wm, bm = map(npf, params["z_mean"])
    wl, bl = map(npf, params["z_logvar"])
    wd1, bd1 = map(npf, params["dec1"])
    wd2, bd2 = map(npf, params["dec2"])
    wrm, brm = map(npf, params["recon_mean"])
    wrl, brl = map(npf, params["recon_logvar"])

    # Cosine DFT folds:  Re(FFT(v))[k] = sum_n v[n] cos(2*pi*n*k/N)
    nd = np.arange(D)
    c_dim = np.cos(2.0 * np.pi * np.outer(nd, nd) / D).astype(np.float32)
    ns = np.arange(S)
    c_seq = np.cos(2.0 * np.pi * np.outer(ns, ns) / S).astype(np.float32)
    wg_fold = c_dim @ wg.T                                  # (D, H2)
    wf_seq = c_seq @ wd.T                                   # (S, H1)

    # LFM dense: block-diag over groups + fold of reshape(B,H1,G).permute(0,2,1)
    w_bd = np.kron(np.eye(G, dtype=np.float32), wf_seq)     # (D, GH), cols (g0, h0)
    b_bd = np.tile(bd, G)                                   # (GH,)
    perm = np.arange(GH).reshape(H1, G).T.reshape(-1)       # c_new(g,h) -> c_old = h*G+g
    w_perm = w_bd[:, perm]
    b_perm = b_bd[perm]

    # Attention rep-expansion constants.
    RH = np.zeros((H1, HH), np.float32)                     # (M@RH)[.., i*H1+j] = M[.., i]
    RT = np.zeros((H1, HH), np.float32)                     # (M@RT)[.., i*H1+j] = M[.., j]
    for i in range(H1):
        for j in range(H1):
            RH[i, i * H1 + j] = 1.0
            RT[j, i * H1 + j] = 1.0
    wk_rep = scale * np.kron(np.eye(G, dtype=np.float32), wk.T @ RH)   # cols (g,i,j)
    bk_rep = scale * np.tile(np.repeat(bk, H1), G)
    wq_rep = np.kron(np.eye(G, dtype=np.float32), wq.T @ RT)           # cols (g,i,j)
    bq_rep = np.tile(np.tile(bq, H1), G)
    wv_rep = np.zeros((GH, H1 * GH), np.float32)                       # cols (i,g,j)
    for g in range(G):
        for i in range(H1):
            wv_rep[g * H1:(g + 1) * H1, i * GH + g * H1:i * GH + (g + 1) * H1] = (
                np.tile(wv[i][:, None], (1, H1)))
    bv_rep = np.repeat(bv, GH)
    TG = np.zeros((HH, H1 * GH), np.float32)                # w2[(i,j)] -> cols (i,g,j)
    for i in range(H1):
        for g in range(G):
            TG[i * H1:(i + 1) * H1, i * GH + g * H1:i * GH + (g + 1) * H1] = (
                np.eye(H1, dtype=np.float32))

    # VAE splits (cat(x,gf,lf) / cat(z,gf,lf) folded into row-split weights).
    we1T = we1.T
    we1x, we1g, we1l = we1T[:D], we1T[D:D + H2], we1T[D + H2:]
    wd1T = wd1.T
    wd1z, wd1g, wd1l = wd1T[:NH8], wd1T[NH8:NH8 + H2], wd1T[NH8 + H2:]
    wml = np.concatenate([wm.T, wl.T], axis=1)              # (NH4, 2*NH8)
    wrml = np.concatenate([wrm.T, wrl.T], axis=1)           # (NH2, 2*D)

    # Slab A: all weights with "large" contraction dims (D / GH / HH).
    slab_a, offA = _pack_cols([
        ("x1", np.concatenate([w_perm, wg_fold, we1x], axis=1)),
        ("kqv", np.concatenate([wk_rep, wq_rep, wv_rep], axis=1)),
        ("tg", TG),
        ("ffd", wf.T),
    ])
    # Slab B: small VAE / helper weights, row-padded to a common K.
    slab_b, offB = _pack_cols([
        ("we1g", we1g), ("we1l", we1l),
        ("we2", we2.T), ("wml", wml),
        ("wd1z", wd1z), ("wd1g", wd1g), ("wd1l", wd1l),
        ("wd2", wd2.T), ("wrml", wrml),
        ("trep", RT),
    ])
    bias_row, boff = _pack_bias([
        ("x1", np.concatenate([b_perm, bg, be1])),
        ("kqv", np.concatenate([bk_rep, bq_rep, bv_rep])),
        ("ffd", bf),
        ("be2", be2),
        ("bml", np.concatenate([bm, bl])),
        ("bd1", bd1),
        ("bd2", bd2),
        ("brml", np.concatenate([brm, brl])),
    ])

    prep = {"wA": jnp.asarray(slab_a), "wB": jnp.asarray(slab_b),
            "bias": jnp.asarray(bias_row)}
    meta = {"dims": {"D": D, "S": S, "G": G, "H1": H1, "H2": H2,
                     "NH": NH, "NH2": NH2, "NH4": NH4, "NH8": NH8},
            "offA": offA, "offB": offB, "boff": boff}
    return prep, meta


# ---------------------------------------------------------------------------
# Host-side randoms (dropout mask + reparameterisation noise), packed.
# ---------------------------------------------------------------------------
def make_randoms(key, batch, meta):
    d = meta["dims"]
    H2, NH8, D = d["H2"], d["NH8"], d["D"]
    k_drop, k_e1, k_e2 = jax.random.split(key, 3)
    keep = jax.random.bernoulli(k_drop, 0.9, (batch, H2))       # Dropout(p=0.1), train mode
    drop_mask = keep.astype(F32) * (1.0 / 0.9)
    eps1 = jax.random.normal(k_e1, (batch, NH8), F32)
    eps2 = jax.random.normal(k_e2, (batch, D), F32)
    return jnp.concatenate([drop_mask, eps1, eps2], axis=1)     # (B, H2+NH8+D)


# ---------------------------------------------------------------------------
# FCVAE forward: one fused pallas_call (gridless; whole-array VMEM blocks).
# ---------------------------------------------------------------------------
def fcvae_forward(prep, x, rand, *, meta):
    B = x.shape[0]
    D = meta["dims"]["D"]
    kernel = functools.partial(fcvae_fused_kernel, meta=meta)
    return pl.pallas_call(
        kernel,
        out_shape=jax.ShapeDtypeStruct((B, D), F32),
    )(x, rand, prep["wA"], prep["wB"], prep["bias"])


# ---------------------------------------------------------------------------
# Pure-JAX reference (mirrors the PyTorch module; shares the same randoms).
# ---------------------------------------------------------------------------
def fcvae_reference(params, x, rand, n_dim, n_hid1, n_hid2, n_seq):
    B = x.shape[0]
    G = n_dim // n_seq
    NH = 2 * n_hid2 + n_dim
    H2, NH8 = n_hid2, NH // 8
    drop = rand[:, :H2]
    eps1 = rand[:, H2:H2 + NH8]
    eps2 = rand[:, H2 + NH8:]

    def lin(v, wb):
        w, b = wb
        return v @ w.T + b

    gf = jnp.maximum(lin(jnp.fft.fft(x).real, params["gfm_dense"]), 0.0) * drop
    xg = x.reshape(B, G, n_seq)
    dns = lin(jnp.fft.fft(xg).real, params["lfm_dense"])         # (B, G, H1)
    a = dns.reshape(B, n_hid1, G).transpose(0, 2, 1)             # (B, G, H1)
    k = lin(a, params["attn_k"])
    q = lin(a, params["attn_q"])
    v = lin(a, params["attn_v"])
    s = jnp.einsum('bgi,bgj->bij', k, q) * (float(n_hid1) ** -0.5)
    w = jax.nn.softmax(s, axis=1)
    o = jnp.einsum('bgi,bij->bgj', v, w).reshape(B, -1)
    lf = jnp.maximum(lin(o, params["lfm_ffd"]), 0.0)

    h = _gelu(lin(jnp.concatenate([x, gf, lf], axis=1), params["enc1"]))
    h = _gelu(lin(h, params["enc2"]))
    z_mean = lin(h, params["z_mean"])
    z_logvar = lin(h, params["z_logvar"])
    z = eps1 * jnp.exp(0.5 * z_logvar) + z_mean
    h = _gelu(lin(jnp.concatenate([z, gf, lf], axis=1), params["dec1"]))
    h = _gelu(lin(h, params["dec2"]))
    mean = lin(h, params["recon_mean"])
    logvar = lin(h, params["recon_logvar"])
    return eps2 * jnp.exp(0.5 * logvar) + mean


# ---------------------------------------------------------------------------
if __name__ == "__main__":
    n_dim, n_hid1, n_hid2, n_seq = 64, 8, 16, 8
    B = 8
    key = jax.random.PRNGKey(0)
    k_params, k_x, k_rng = jax.random.split(key, 3)

    params = init_params(k_params, n_dim, n_hid1, n_hid2, n_seq)
    prep, meta = prepare_params(params, n_dim, n_hid1, n_hid2, n_seq)
    x = jax.random.normal(k_x, (B, n_dim), F32)
    rand = make_randoms(k_rng, B, meta)

    fwd = jax.jit(functools.partial(fcvae_forward, meta=meta))
    x_hat = jax.block_until_ready(fwd(prep, x, rand))

    assert x_hat.shape == (B, n_dim) and x_hat.dtype == F32
    assert bool(jnp.all(jnp.isfinite(x_hat)))

    # Cross-check against a pure-JAX re-implementation of the PyTorch forward.
    x_ref = jax.block_until_ready(
        fcvae_reference(params, x, rand, n_dim, n_hid1, n_hid2, n_seq))
    assert bool(jnp.allclose(x_hat, x_ref, atol=5e-3, rtol=5e-3)), (
        float(jnp.max(jnp.abs(x_hat - x_ref))))

    print("KERNEL_OK")
</pallas_src>

<mosaic_0001>
module attributes {stable_mosaic.version = 11 : i64} {
  func.func @fcvae_fused_kernel(%arg0: memref<8x64xf32, #tpu.memory_space<vmem>>, %arg1: memref<8x92xf32, #tpu.memory_space<vmem>>, %arg2: memref<64x2192xf32, #tpu.memory_space<vmem>>, %arg3: memref<48x456xf32, #tpu.memory_space<vmem>>, %arg4: memref<1x1928xf32, #tpu.memory_space<vmem>>, %arg5: memref<8x64xf32, #tpu.memory_space<vmem>>) attributes {dimension_semantics = [], scalar_prefetch = 0 : i64, scratch_operands = 0 : i64, tpu.core_type = #tpu.core_type<tc>} {
    %c0 = arith.constant 0 : index
    %c0_0 = arith.constant 0 : index
    %0 = vector.load %arg0[%c0, %c0_0] : memref<8x64xf32, #tpu.memory_space<vmem>>, vector<8x64xf32>
    %c0_1 = arith.constant 0 : index
    %c0_2 = arith.constant 0 : index
    %1 = vector.load %arg1[%c0_1, %c0_2] : memref<8x92xf32, #tpu.memory_space<vmem>>, vector<8x16xf32>
    %c0_3 = arith.constant 0 : index
    %c16 = arith.constant 16 : index
    %2 = vector.load %arg1[%c0_3, %c16] : memref<8x92xf32, #tpu.memory_space<vmem>>, vector<8x12xf32>
    %c0_4 = arith.constant 0 : index
    %c28 = arith.constant 28 : index
    %3 = vector.load %arg1[%c0_4, %c28] : memref<8x92xf32, #tpu.memory_space<vmem>>, vector<8x64xf32>
    %c0_5 = arith.constant 0 : index
    %c0_6 = arith.constant 0 : index
    %4 = vector.load %arg2[%c0_5, %c0_6] : memref<64x2192xf32, #tpu.memory_space<vmem>>, vector<64x128xf32>
    %cst = arith.constant dense<0.000000e+00> : vector<8x128xf32>
    %5 = tpu.matmul %0, %4, %cst {dimension_numbers = #tpu.dot_dimension_numbers<[1], [0], [0], [1], [0, 0, 1, 1], [], []>} : vector<8x64xf32>, vector<64x128xf32>, vector<8x128xf32> -> vector<8x128xf32>
    %c0_7 = arith.constant 0 : index
    %c0_8 = arith.constant 0 : index
    %6 = vector.load %arg4[%c0_7, %c0_8] : memref<1x1928xf32, #tpu.memory_space<vmem>>, vector<1x128xf32>
    %7 = vector.broadcast %6 : vector<1x128xf32> to vector<8x128xf32>
    %8 = arith.addf %5, %7 : vector<8x128xf32>
    %9 = vector.extract_strided_slice %8 {offsets = [0, 0], sizes = [8, 64], strides = [1, 1]} : vector<8x128xf32> to vector<8x64xf32>
    %10 = vector.extract_strided_slice %8 {offsets = [0, 64], sizes = [8, 16], strides = [1, 1]} : vector<8x128xf32> to vector<8x16xf32>
    %11 = vector.extract_strided_slice %8 {offsets = [0, 80], sizes = [8, 48], strides = [1, 1]} : vector<8x128xf32> to vector<8x48xf32>
    %cst_9 = arith.constant 0.000000e+00 : f32
    %12 = vector.broadcast %cst_9 : f32 to vector<8x16xf32>
    %13 = arith.maximumf %10, %12 : vector<8x16xf32>
    %14 = arith.mulf %13, %1 : vector<8x16xf32>
    %c0_10 = arith.constant 0 : index
    %c128 = arith.constant 128 : index
    %15 = vector.load %arg2[%c0_10, %c128] : memref<64x2192xf32, #tpu.memory_space<vmem>>, vector<64x1536xf32>
    %cst_11 = arith.constant dense<0.000000e+00> : vector<8x1536xf32>
    %16 = tpu.matmul %9, %15, %cst_11 {dimension_numbers = #tpu.dot_dimension_numbers<[1], [0], [0], [1], [0, 0, 1, 1], [], []>} : vector<8x64xf32>, vector<64x1536xf32>, vector<8x1536xf32> -> vector<8x1536xf32>
    %c0_12 = arith.constant 0 : index
    %c128_13 = arith.constant 128 : index
    %17 = vector.load %arg4[%c0_12, %c128_13] : memref<1x1928xf32, #tpu.memory_space<vmem>>, vector<1x1536xf32>
    %18 = vector.broadcast %17 : vector<1x1536xf32> to vector<8x1536xf32>
    %19 = arith.addf %16, %18 : vector<8x1536xf32>
    %20 = vector.extract_strided_slice %19 {offsets = [0, 0], sizes = [8, 512], strides = [1, 1]} : vector<8x1536xf32> to vector<8x512xf32>
    %21 = vector.extract_strided_slice %19 {offsets = [0, 512], sizes = [8, 512], strides = [1, 1]} : vector<8x1536xf32> to vector<8x512xf32>
    %22 = vector.extract_strided_slice %19 {offsets = [0, 1024], sizes = [8, 512], strides = [1, 1]} : vector<8x1536xf32> to vector<8x512xf32>
    %23 = arith.mulf %20, %21 : vector<8x512xf32>
    %24 = vector.extract_strided_slice %23 {offsets = [0, 0], sizes = [8, 64], strides = [1, 1]} : vector<8x512xf32> to vector<8x64xf32>
    %25 = vector.extract_strided_slice %23 {offsets = [0, 64], sizes = [8, 64], strides = [1, 1]} : vector<8x512xf32> to vector<8x64xf32>
    %26 = arith.addf %24, %25 : vector<8x64xf32>
    %27 = vector.extract_strided_slice %23 {offsets = [0, 128], sizes = [8, 64], strides = [1, 1]} : vector<8x512xf32> to vector<8x64xf32>
    %28 = arith.addf %26, %27 : vector<8x64xf32>
    %29 = vector.extract_strided_slice %23 {offsets = [0, 192], sizes = [8, 64], strides = [1, 1]} : vector<8x512xf32> to vector<8x64xf32>
    %30 = arith.addf %28, %29 : vector<8x64xf32>
    %31 = vector.extract_strided_slice %23 {offsets = [0, 256], sizes = [8, 64], strides = [1, 1]} : vector<8x512xf32> to vector<8x64xf32>
    %32 = arith.addf %30, %31 : vector<8x64xf32>
    %33 = vector.extract_strided_slice %23 {offsets = [0, 320], sizes = [8, 64], strides = [1, 1]} : vector<8x512xf32> to vector<8x64xf32>
    %34 = arith.addf %32, %33 : vector<8x64xf32>
    %35 = vector.extract_strided_slice %23 {offsets = [0, 384], sizes = [8, 64], strides = [1, 1]} : vector<8x512xf32> to vector<8x64xf32>
    %36 = arith.addf %34, %35 : vector<8x64xf32>
    %37 = vector.extract_strided_slice %23 {offsets = [0, 448], sizes = [8, 64], strides = [1, 1]} : vector<8x512xf32> to vector<8x64xf32>
    %38 = arith.addf %36, %37 : vector<8x64xf32>
    %c0_14 = arith.constant 0 : index
    %c392 = arith.constant 392 : index
    %39 = vector.load %arg3[%c0_14, %c392] : memref<48x456xf32, #tpu.memory_space<vmem>>, vector<8x64xf32>
    %40 = vector.extract_strided_slice %38 {offsets = [0, 0], sizes = [8, 8], strides = [1, 1]} : vector<8x64xf32> to vector<8x8xf32>
    %41 = vector.extract_strided_slice %38 {offsets = [0, 8], sizes = [8, 8], strides = [1, 1]} : vector<8x64xf32> to vector<8x8xf32>
    %42 = arith.maximumf %40, %41 : vector<8x8xf32>
    %43 = vector.extract_strided_slice %38 {offsets = [0, 16], sizes = [8, 8], strides = [1, 1]} : vector<8x64xf32> to vector<8x8xf32>
    %44 = arith.maximumf %42, %43 : vector<8x8xf32>
    %45 = vector.extract_strided_slice %38 {offsets = [0, 24], sizes = [8, 8], strides = [1, 1]} : vector<8x64xf32> to vector<8x8xf32>
    %46 = arith.maximumf %44, %45 : vector<8x8xf32>
    %47 = vector.extract_strided_slice %38 {offsets = [0, 32], sizes = [8, 8], strides = [1, 1]} : vector<8x64xf32> to vector<8x8xf32>
    %48 = arith.maximumf %46, %47 : vector<8x8xf32>
    %49 = vector.extract_strided_slice %38 {offsets = [0, 40], sizes = [8, 8], strides = [1, 1]} : vector<8x64xf32> to vector<8x8xf32>
    %50 = arith.maximumf %48, %49 : vector<8x8xf32>
    %51 = vector.extract_strided_slice %38 {offsets = [0, 48], sizes = [8, 8], strides = [1, 1]} : vector<8x64xf32> to vector<8x8xf32>
    %52 = arith.maximumf %50, %51 : vector<8x8xf32>
    %53 = vector.extract_strided_slice %38 {offsets = [0, 56], sizes = [8, 8], strides = [1, 1]} : vector<8x64xf32> to vector<8x8xf32>
    %54 = arith.maximumf %52, %53 : vector<8x8xf32>
    %cst_15 = arith.constant dense<0.000000e+00> : vector<8x64xf32>
    %55 = tpu.matmul %54, %39, %cst_15 {dimension_numbers = #tpu.dot_dimension_numbers<[1], [0], [0], [1], [0, 0, 1, 1], [], []>} : vector<8x8xf32>, vector<8x64xf32>, vector<8x64xf32> -> vector<8x64xf32>
    %56 = arith.subf %38, %55 : vector<8x64xf32>
    %57 = math.exp %56 : vector<8x64xf32>
    %58 = vector.extract_strided_slice %57 {offsets = [0, 0], sizes = [8, 8], strides = [1, 1]} : vector<8x64xf32> to vector<8x8xf32>
    %59 = vector.extract_strided_slice %57 {offsets = [0, 8], sizes = [8, 8], strides = [1, 1]} : vector<8x64xf32> to vector<8x8xf32>
    %60 = arith.addf %58, %59 : vector<8x8xf32>
    %61 = vector.extract_strided_slice %57 {offsets = [0, 16], sizes = [8, 8], strides = [1, 1]} : vector<8x64xf32> to vector<8x8xf32>
    %62 = arith.addf %60, %61 : vector<8x8xf32>
    %63 = vector.extract_strided_slice %57 {offsets = [0, 24], sizes = [8, 8], strides = [1, 1]} : vector<8x64xf32> to vector<8x8xf32>
    %64 = arith.addf %62, %63 : vector<8x8xf32>
    %65 = vector.extract_strided_slice %57 {offsets = [0, 32], sizes = [8, 8], strides = [1, 1]} : vector<8x64xf32> to vector<8x8xf32>
    %66 = arith.addf %64, %65 : vector<8x8xf32>
    %67 = vector.extract_strided_slice %57 {offsets = [0, 40], sizes = [8, 8], strides = [1, 1]} : vector<8x64xf32> to vector<8x8xf32>
    %68 = arith.addf %66, %67 : vector<8x8xf32>
    %69 = vector.extract_strided_slice %57 {offsets = [0, 48], sizes = [8, 8], strides = [1, 1]} : vector<8x64xf32> to vector<8x8xf32>
    %70 = arith.addf %68, %69 : vector<8x8xf32>
    %71 = vector.extract_strided_slice %57 {offsets = [0, 56], sizes = [8, 8], strides = [1, 1]} : vector<8x64xf32> to vector<8x8xf32>
    %72 = arith.addf %70, %71 : vector<8x8xf32>
    %cst_16 = arith.constant dense<0.000000e+00> : vector<8x64xf32>
    %73 = tpu.matmul %72, %39, %cst_16 {dimension_numbers = #tpu.dot_dimension_numbers<[1], [0], [0], [1], [0, 0, 1, 1], [], []>} : vector<8x8xf32>, vector<8x64xf32>, vector<8x64xf32> -> vector<8x64xf32>
    %74 = arith.divf %57, %73 : vector<8x64xf32>
    %c0_17 = arith.constant 0 : index
    %c1664 = arith.constant 1664 : index
    %75 = vector.load %arg2[%c0_17, %c1664] : memref<64x2192xf32, #tpu.memory_space<vmem>>, vector<64x512xf32>
    %cst_18 = arith.constant dense<0.000000e+00> : vector<8x512xf32>
    %76 = tpu.matmul %74, %75, %cst_18 {dimension_numbers = #tpu.dot_dimension_numbers<[1], [0], [0], [1], [0, 0, 1, 1], [], []>} : vector<8x64xf32>, vector<64x512xf32>, vector<8x512xf32> -> vector<8x512xf32>
    %77 = arith.mulf %22, %76 : vector<8x512xf32>
    %78 = vector.extract_strided_slice %77 {offsets = [0, 0], sizes = [8, 64], strides = [1, 1]} : vector<8x512xf32> to vector<8x64xf32>
    %79 = vector.extract_strided_slice %77 {offsets = [0, 64], sizes = [8, 64], strides = [1, 1]} : vector<8x512xf32> to vector<8x64xf32>
    %80 = arith.addf %78, %79 : vector<8x64xf32>
    %81 = vector.extract_strided_slice %77 {offsets = [0, 128], sizes = [8, 64], strides = [1, 1]} : vector<8x512xf32> to vector<8x64xf32>
    %82 = arith.addf %80, %81 : vector<8x64xf32>
    %83 = vector.extract_strided_slice %77 {offsets = [0, 192], sizes = [8, 64], strides = [1, 1]} : vector<8x512xf32> to vector<8x64xf32>
    %84 = arith.addf %82, %83 : vector<8x64xf32>
    %85 = vector.extract_strided_slice %77 {offsets = [0, 256], sizes = [8, 64], strides = [1, 1]} : vector<8x512xf32> to vector<8x64xf32>
    %86 = arith.addf %84, %85 : vector<8x64xf32>
    %87 = vector.extract_strided_slice %77 {offsets = [0, 320], sizes = [8, 64], strides = [1, 1]} : vector<8x512xf32> to vector<8x64xf32>
    %88 = arith.addf %86, %87 : vector<8x64xf32>
    %89 = vector.extract_strided_slice %77 {offsets = [0, 384], sizes = [8, 64], strides = [1, 1]} : vector<8x512xf32> to vector<8x64xf32>
    %90 = arith.addf %88, %89 : vector<8x64xf32>
    %91 = vector.extract_strided_slice %77 {offsets = [0, 448], sizes = [8, 64], strides = [1, 1]} : vector<8x512xf32> to vector<8x64xf32>
    %92 = arith.addf %90, %91 : vector<8x64xf32>
    %c0_19 = arith.constant 0 : index
    %c2176 = arith.constant 2176 : index
    %93 = vector.load %arg2[%c0_19, %c2176] : memref<64x2192xf32, #tpu.memory_space<vmem>>, vector<64x16xf32>
    %cst_20 = arith.constant dense<0.000000e+00> : vector<8x16xf32>
    %94 = tpu.matmul %92, %93, %cst_20 {dimension_numbers = #tpu.dot_dimension_numbers<[1], [0], [0], [1], [0, 0, 1, 1], [], []>} : vector<8x64xf32>, vector<64x16xf32>, vector<8x16xf32> -> vector<8x16xf32>
    %c0_21 = arith.constant 0 : index
    %c1664_22 = arith.constant 1664 : index
    %95 = vector.load %arg4[%c0_21, %c1664_22] : memref<1x1928xf32, #tpu.memory_space<vmem>>, vector<1x16xf32>
    %96 = vector.broadcast %95 : vector<1x16xf32> to vector<8x16xf32>
    %97 = arith.addf %94, %96 : vector<8x16xf32>
    %cst_23 = arith.constant 0.000000e+00 : f32
    %98 = vector.broadcast %cst_23 : f32 to vector<8x16xf32>
    %99 = arith.maximumf %97, %98 : vector<8x16xf32>
    %c0_24 = arith.constant 0 : index
    %c0_25 = arith.constant 0 : index
    %100 = vector.load %arg3[%c0_24, %c0_25] : memref<48x456xf32, #tpu.memory_space<vmem>>, vector<16x48xf32>
    %cst_26 = arith.constant dense<0.000000e+00> : vector<8x48xf32>
    %101 = tpu.matmul %14, %100, %cst_26 {dimension_numbers = #tpu.dot_dimension_numbers<[1], [0], [0], [1], [0, 0, 1, 1], [], []>} : vector<8x16xf32>, vector<16x48xf32>, vector<8x48xf32> -> vector<8x48xf32>
    %102 = arith.addf %11, %101 : vector<8x48xf32>
    %c0_27 = arith.constant 0 : index
    %c48 = arith.constant 48 : index
    %103 = vector.load %arg3[%c0_27, %c48] : memref<48x456xf32, #tpu.memory_space<vmem>>, vector<16x48xf32>
    %cst_28 = arith.constant dense<0.000000e+00> : vector<8x48xf32>
    %104 = tpu.matmul %99, %103, %cst_28 {dimension_numbers = #tpu.dot_dimension_numbers<[1], [0], [0], [1], [0, 0, 1, 1], [], []>} : vector<8x16xf32>, vector<16x48xf32>, vector<8x48xf32> -> vector<8x48xf32>
    %105 = arith.addf %102, %104 : vector<8x48xf32>
    %cst_29 = arith.constant 5.000000e-01 : f32
    %106 = vector.broadcast %cst_29 : f32 to vector<8x48xf32>
    %107 = arith.mulf %106, %105 : vector<8x48xf32>
    %cst_30 = arith.constant 0.707106769 : f32
    %108 = vector.broadcast %cst_30 : f32 to vector<8x48xf32>
    %109 = arith.mulf %105, %108 : vector<8x48xf32>
    %110 = math.absf %109 : vector<8x48xf32>
    %cst_31 = arith.constant 0.327591091 : f32
    %111 = vector.broadcast %cst_31 : f32 to vector<8x48xf32>
    %112 = arith.mulf %111, %110 : vector<8x48xf32>
    %cst_32 = arith.constant 1.000000e+00 : f32
    %113 = vector.broadcast %cst_32 : f32 to vector<8x48xf32>
    %114 = arith.addf %113, %112 : vector<8x48xf32>
    %cst_33 = arith.constant 1.000000e+00 : f32
    %115 = vector.broadcast %cst_33 : f32 to vector<8x48xf32>
    %116 = arith.divf %115, %114 : vector<8x48xf32>
    %cst_34 = arith.constant 1.06140542 : f32
    %117 = vector.broadcast %cst_34 : f32 to vector<8x48xf32>
    %118 = arith.mulf %117, %116 : vector<8x48xf32>
    %cst_35 = arith.constant -1.45315206 : f32
    %119 = vector.broadcast %cst_35 : f32 to vector<8x48xf32>
    %120 = arith.addf %118, %119 : vector<8x48xf32>
    %121 = arith.mulf %120, %116 : vector<8x48xf32>
    %cst_36 = arith.constant 1.42141378 : f32
    %122 = vector.broadcast %cst_36 : f32 to vector<8x48xf32>
    %123 = arith.addf %121, %122 : vector<8x48xf32>
    %124 = arith.mulf %123, %116 : vector<8x48xf32>
    %cst_37 = arith.constant -0.284496725 : f32
    %125 = vector.broadcast %cst_37 : f32 to vector<8x48xf32>
    %126 = arith.addf %124, %125 : vector<8x48xf32>
    %127 = arith.mulf %126, %116 : vector<8x48xf32>
    %cst_38 = arith.constant 0.254829586 : f32
    %128 = vector.broadcast %cst_38 : f32 to vector<8x48xf32>
    %129 = arith.addf %127, %128 : vector<8x48xf32>
    %130 = arith.mulf %129, %116 : vector<8x48xf32>
    %cst_39 = arith.constant 0.000000e+00 : f32
    %131 = vector.broadcast %cst_39 : f32 to vector<8x48xf32>
    %132 = arith.subf %131, %110 : vector<8x48xf32>
    %133 = arith.mulf %132, %110 : vector<8x48xf32>
    %134 = math.exp %133 : vector<8x48xf32>
    %135 = arith.mulf %130, %134 : vector<8x48xf32>
    %cst_40 = arith.constant 1.000000e+00 : f32
    %136 = vector.broadcast %cst_40 : f32 to vector<8x48xf32>
    %137 = arith.subf %136, %135 : vector<8x48xf32>
    %cst_41 = arith.constant 0.000000e+00 : f32
    %138 = vector.broadcast %cst_41 : f32 to vector<8x48xf32>
    %139 = arith.cmpf oge, %109, %138 : vector<8x48xf32>
    %cst_42 = arith.constant 0.000000e+00 : f32
    %140 = vector.broadcast %cst_42 : f32 to vector<8x48xf32>
    %141 = arith.subf %140, %137 : vector<8x48xf32>
    %142 = arith.select %139, %137, %141 : vector<8x48xi1>, vector<8x48xf32>
    %cst_43 = arith.constant 1.000000e+00 : f32
    %143 = vector.broadcast %cst_43 : f32 to vector<8x48xf32>
    %144 = arith.addf %143, %142 : vector<8x48xf32>
    %145 = arith.mulf %107, %144 : vector<8x48xf32>
    %c0_44 = arith.constant 0 : index
    %c96 = arith.constant 96 : index
    %146 = vector.load %arg3[%c0_44, %c96] : memref<48x456xf32, #tpu.memory_space<vmem>>, vector<48x24xf32>
    %cst_45 = arith.constant dense<0.000000e+00> : vector<8x24xf32>
    %147 = tpu.matmul %145, %146, %cst_45 {dimension_numbers = #tpu.dot_dimension_numbers<[1], [0], [0], [1], [0, 0, 1, 1], [], []>} : vector<8x48xf32>, vector<48x24xf32>, vector<8x24xf32> -> vector<8x24xf32>
    %c0_46 = arith.constant 0 : index
    %c1680 = arith.constant 1680 : index
    %148 = vector.load %arg4[%c0_46, %c1680] : memref<1x1928xf32, #tpu.memory_space<vmem>>, vector<1x24xf32>
    %149 = vector.broadcast %148 : vector<1x24xf32> to vector<8x24xf32>
    %150 = arith.addf %147, %149 : vector<8x24xf32>
    %cst_47 = arith.constant 5.000000e-01 : f32
    %151 = vector.broadcast %cst_47 : f32 to vector<8x24xf32>
    %152 = arith.mulf %151, %150 : vector<8x24xf32>
    %cst_48 = arith.constant 0.707106769 : f32
    %153 = vector.broadcast %cst_48 : f32 to vector<8x24xf32>
    %154 = arith.mulf %150, %153 : vector<8x24xf32>
    %155 = math.absf %154 : vector<8x24xf32>
    %cst_49 = arith.constant 0.327591091 : f32
    %156 = vector.broadcast %cst_49 : f32 to vector<8x24xf32>
    %157 = arith.mulf %156, %155 : vector<8x24xf32>
    %cst_50 = arith.constant 1.000000e+00 : f32
    %158 = vector.broadcast %cst_50 : f32 to vector<8x24xf32>
    %159 = arith.addf %158, %157 : vector<8x24xf32>
    %cst_51 = arith.constant 1.000000e+00 : f32
    %160 = vector.broadcast %cst_51 : f32 to vector<8x24xf32>
    %161 = arith.divf %160, %159 : vector<8x24xf32>
    %cst_52 = arith.constant 1.06140542 : f32
    %162 = vector.broadcast %cst_52 : f32 to vector<8x24xf32>
    %163 = arith.mulf %162, %161 : vector<8x24xf32>
    %cst_53 = arith.constant -1.45315206 : f32
    %164 = vector.broadcast %cst_53 : f32 to vector<8x24xf32>
    %165 = arith.addf %163, %164 : vector<8x24xf32>
    %166 = arith.mulf %165, %161 : vector<8x24xf32>
    %cst_54 = arith.constant 1.42141378 : f32
    %167 = vector.broadcast %cst_54 : f32 to vector<8x24xf32>
    %168 = arith.addf %166, %167 : vector<8x24xf32>
    %169 = arith.mulf %168, %161 : vector<8x24xf32>
    %cst_55 = arith.constant -0.284496725 : f32
    %170 = vector.broadcast %cst_55 : f32 to vector<8x24xf32>
    %171 = arith.addf %169, %170 : vector<8x24xf32>
    %172 = arith.mulf %171, %161 : vector<8x24xf32>
    %cst_56 = arith.constant 0.254829586 : f32
    %173 = vector.broadcast %cst_56 : f32 to vector<8x24xf32>
    %174 = arith.addf %172, %173 : vector<8x24xf32>
    %175 = arith.mulf %174, %161 : vector<8x24xf32>
    %cst_57 = arith.constant 0.000000e+00 : f32
    %176 = vector.broadcast %cst_57 : f32 to vector<8x24xf32>
    %177 = arith.subf %176, %155 : vector<8x24xf32>
    %178 = arith.mulf %177, %155 : vector<8x24xf32>
    %179 = math.exp %178 : vector<8x24xf32>
    %180 = arith.mulf %175, %179 : vector<8x24xf32>
    %cst_58 = arith.constant 1.000000e+00 : f32
    %181 = vector.broadcast %cst_58 : f32 to vector<8x24xf32>
    %182 = arith.subf %181, %180 : vector<8x24xf32>
    %cst_59 = arith.constant 0.000000e+00 : f32
    %183 = vector.broadcast %cst_59 : f32 to vector<8x24xf32>
    %184 = arith.cmpf oge, %154, %183 : vector<8x24xf32>
    %cst_60 = arith.constant 0.000000e+00 : f32
    %185 = vector.broadcast %cst_60 : f32 to vector<8x24xf32>
    %186 = arith.subf %185, %182 : vector<8x24xf32>
    %187 = arith.select %184, %182, %186 : vector<8x24xi1>, vector<8x24xf32>
    %cst_61 = arith.constant 1.000000e+00 : f32
    %188 = vector.broadcast %cst_61 : f32 to vector<8x24xf32>
    %189 = arith.addf %188, %187 : vector<8x24xf32>
    %190 = arith.mulf %152, %189 : vector<8x24xf32>
    %c0_62 = arith.constant 0 : index
    %c120 = arith.constant 120 : index
    %191 = vector.load %arg3[%c0_62, %c120] : memref<48x456xf32, #tpu.memory_space<vmem>>, vector<24x24xf32>
    %cst_63 = arith.constant dense<0.000000e+00> : vector<8x24xf32>
    %192 = tpu.matmul %190, %191, %cst_63 {dimension_numbers = #tpu.dot_dimension_numbers<[1], [0], [0], [1], [0, 0, 1, 1], [], []>} : vector<8x24xf32>, vector<24x24xf32>, vector<8x24xf32> -> vector<8x24xf32>
    %c0_64 = arith.constant 0 : index
    %c1704 = arith.constant 1704 : index
    %193 = vector.load %arg4[%c0_64, %c1704] : memref<1x1928xf32, #tpu.memory_space<vmem>>, vector<1x24xf32>
    %194 = vector.broadcast %193 : vector<1x24xf32> to vector<8x24xf32>
    %195 = arith.addf %192, %194 : vector<8x24xf32>
    %196 = vector.extract_strided_slice %195 {offsets = [0, 0], sizes = [8, 12], strides = [1, 1]} : vector<8x24xf32> to vector<8x12xf32>
    %197 = vector.extract_strided_slice %195 {offsets = [0, 12], sizes = [8, 12], strides = [1, 1]} : vector<8x24xf32> to vector<8x12xf32>
    %cst_65 = arith.constant 5.000000e-01 : f32
    %198 = vector.broadcast %cst_65 : f32 to vector<8x12xf32>
    %199 = arith.mulf %198, %197 : vector<8x12xf32>
    %200 = math.exp %199 : vector<8x12xf32>
    %201 = arith.mulf %2, %200 : vector<8x12xf32>
    %202 = arith.addf %201, %196 : vector<8x12xf32>
    %c0_66 = arith.constant 0 : index
    %c144 = arith.constant 144 : index
    %203 = vector.load %arg3[%c0_66, %c144] : memref<48x456xf32, #tpu.memory_space<vmem>>, vector<12x24xf32>
    %cst_67 = arith.constant dense<0.000000e+00> : vector<8x24xf32>
    %204 = tpu.matmul %202, %203, %cst_67 {dimension_numbers = #tpu.dot_dimension_numbers<[1], [0], [0], [1], [0, 0, 1, 1], [], []>} : vector<8x12xf32>, vector<12x24xf32>, vector<8x24xf32> -> vector<8x24xf32>
    %c0_68 = arith.constant 0 : index
    %c168 = arith.constant 168 : index
    %205 = vector.load %arg3[%c0_68, %c168] : memref<48x456xf32, #tpu.memory_space<vmem>>, vector<16x24xf32>
    %cst_69 = arith.constant dense<0.000000e+00> : vector<8x24xf32>
    %206 = tpu.matmul %14, %205, %cst_69 {dimension_numbers = #tpu.dot_dimension_numbers<[1], [0], [0], [1], [0, 0, 1, 1], [], []>} : vector<8x16xf32>, vector<16x24xf32>, vector<8x24xf32> -> vector<8x24xf32>
    %207 = arith.addf %204, %206 : vector<8x24xf32>
    %c0_70 = arith.constant 0 : index
    %c192 = arith.constant 192 : index
    %208 = vector.load %arg3[%c0_70, %c192] : memref<48x456xf32, #tpu.memory_space<vmem>>, vector<16x24xf32>
    %cst_71 = arith.constant dense<0.000000e+00> : vector<8x24xf32>
    %209 = tpu.matmul %99, %208, %cst_71 {dimension_numbers = #tpu.dot_dimension_numbers<[1], [0], [0], [1], [0, 0, 1, 1], [], []>} : vector<8x16xf32>, vector<16x24xf32>, vector<8x24xf32> -> vector<8x24xf32>
    %210 = arith.addf %207, %209 : vector<8x24xf32>
    %c0_72 = arith.constant 0 : index
    %c1728 = arith.constant 1728 : index
    %211 = vector.load %arg4[%c0_72, %c1728] : memref<1x1928xf32, #tpu.memory_space<vmem>>, vector<1x24xf32>
    %212 = vector.broadcast %211 : vector<1x24xf32> to vector<8x24xf32>
    %213 = arith.addf %210, %212 : vector<8x24xf32>
    %cst_73 = arith.constant 5.000000e-01 : f32
    %214 = vector.broadcast %cst_73 : f32 to vector<8x24xf32>
    %215 = arith.mulf %214, %213 : vector<8x24xf32>
    %cst_74 = arith.constant 0.707106769 : f32
    %216 = vector.broadcast %cst_74 : f32 to vector<8x24xf32>
    %217 = arith.mulf %213, %216 : vector<8x24xf32>
    %218 = math.absf %217 : vector<8x24xf32>
    %cst_75 = arith.constant 0.327591091 : f32
    %219 = vector.broadcast %cst_75 : f32 to vector<8x24xf32>
    %220 = arith.mulf %219, %218 : vector<8x24xf32>
    %cst_76 = arith.constant 1.000000e+00 : f32
    %221 = vector.broadcast %cst_76 : f32 to vector<8x24xf32>
    %222 = arith.addf %221, %220 : vector<8x24xf32>
    %cst_77 = arith.constant 1.000000e+00 : f32
    %223 = vector.broadcast %cst_77 : f32 to vector<8x24xf32>
    %224 = arith.divf %223, %222 : vector<8x24xf32>
    %cst_78 = arith.constant 1.06140542 : f32
    %225 = vector.broadcast %cst_78 : f32 to vector<8x24xf32>
    %226 = arith.mulf %225, %224 : vector<8x24xf32>
    %cst_79 = arith.constant -1.45315206 : f32
    %227 = vector.broadcast %cst_79 : f32 to vector<8x24xf32>
    %228 = arith.addf %226, %227 : vector<8x24xf32>
    %229 = arith.mulf %228, %224 : vector<8x24xf32>
    %cst_80 = arith.constant 1.42141378 : f32
    %230 = vector.broadcast %cst_80 : f32 to vector<8x24xf32>
    %231 = arith.addf %229, %230 : vector<8x24xf32>
    %232 = arith.mulf %231, %224 : vector<8x24xf32>
    %cst_81 = arith.constant -0.284496725 : f32
    %233 = vector.broadcast %cst_81 : f32 to vector<8x24xf32>
    %234 = arith.addf %232, %233 : vector<8x24xf32>
    %235 = arith.mulf %234, %224 : vector<8x24xf32>
    %cst_82 = arith.constant 0.254829586 : f32
    %236 = vector.broadcast %cst_82 : f32 to vector<8x24xf32>
    %237 = arith.addf %235, %236 : vector<8x24xf32>
    %238 = arith.mulf %237, %224 : vector<8x24xf32>
    %cst_83 = arith.constant 0.000000e+00 : f32
    %239 = vector.broadcast %cst_83 : f32 to vector<8x24xf32>
    %240 = arith.subf %239, %218 : vector<8x24xf32>
    %241 = arith.mulf %240, %218 : vector<8x24xf32>
    %242 = math.exp %241 : vector<8x24xf32>
    %243 = arith.mulf %238, %242 : vector<8x24xf32>
    %cst_84 = arith.constant 1.000000e+00 : f32
    %244 = vector.broadcast %cst_84 : f32 to vector<8x24xf32>
    %245 = arith.subf %244, %243 : vector<8x24xf32>
    %cst_85 = arith.constant 0.000000e+00 : f32
    %246 = vector.broadcast %cst_85 : f32 to vector<8x24xf32>
    %247 = arith.cmpf oge, %217, %246 : vector<8x24xf32>
    %cst_86 = arith.constant 0.000000e+00 : f32
    %248 = vector.broadcast %cst_86 : f32 to vector<8x24xf32>
    %249 = arith.subf %248, %245 : vector<8x24xf32>
    %250 = arith.select %247, %245, %249 : vector<8x24xi1>, vector<8x24xf32>
    %cst_87 = arith.constant 1.000000e+00 : f32
    %251 = vector.broadcast %cst_87 : f32 to vector<8x24xf32>
    %252 = arith.addf %251, %250 : vector<8x24xf32>
    %253 = arith.mulf %215, %252 : vector<8x24xf32>
    %c0_88 = arith.constant 0 : index
    %c216 = arith.constant 216 : index
    %254 = vector.load %arg3[%c0_88, %c216] : memref<48x456xf32, #tpu.memory_space<vmem>>, vector<24x48xf32>
    %cst_89 = arith.constant dense<0.000000e+00> : vector<8x48xf32>
    %255 = tpu.matmul %253, %254, %cst_89 {dimension_numbers = #tpu.dot_dimension_numbers<[1], [0], [0], [1], [0, 0, 1, 1], [], []>} : vector<8x24xf32>, vector<24x48xf32>, vector<8x48xf32> -> vector<8x48xf32>
    %c0_90 = arith.constant 0 : index
    %c1752 = arith.constant 1752 : index
    %256 = vector.load %arg4[%c0_90, %c1752] : memref<1x1928xf32, #tpu.memory_space<vmem>>, vector<1x48xf32>
    %257 = vector.broadcast %256 : vector<1x48xf32> to vector<8x48xf32>
    %258 = arith.addf %255, %257 : vector<8x48xf32>
    %cst_91 = arith.constant 5.000000e-01 : f32
    %259 = vector.broadcast %cst_91 : f32 to vector<8x48xf32>
    %260 = arith.mulf %259, %258 : vector<8x48xf32>
    %cst_92 = arith.constant 0.707106769 : f32
    %261 = vector.broadcast %cst_92 : f32 to vector<8x48xf32>
    %262 = arith.mulf %258, %261 : vector<8x48xf32>
    %263 = math.absf %262 : vector<8x48xf32>
    %cst_93 = arith.constant 0.327591091 : f32
    %264 = vector.broadcast %cst_93 : f32 to vector<8x48xf32>
    %265 = arith.mulf %264, %263 : vector<8x48xf32>
    %cst_94 = arith.constant 1.000000e+00 : f32
    %266 = vector.broadcast %cst_94 : f32 to vector<8x48xf32>
    %267 = arith.addf %266, %265 : vector<8x48xf32>
    %cst_95 = arith.constant 1.000000e+00 : f32
    %268 = vector.broadcast %cst_95 : f32 to vector<8x48xf32>
    %269 = arith.divf %268, %267 : vector<8x48xf32>
    %cst_96 = arith.constant 1.06140542 : f32
    %270 = vector.broadcast %cst_96 : f32 to vector<8x48xf32>
    %271 = arith.mulf %270, %269 : vector<8x48xf32>
    %cst_97 = arith.constant -1.45315206 : f32
    %272 = vector.broadcast %cst_97 : f32 to vector<8x48xf32>
    %273 = arith.addf %271, %272 : vector<8x48xf32>
    %274 = arith.mulf %273, %269 : vector<8x48xf32>
    %cst_98 = arith.constant 1.42141378 : f32
    %275 = vector.broadcast %cst_98 : f32 to vector<8x48xf32>
    %276 = arith.addf %274, %275 : vector<8x48xf32>
    %277 = arith.mulf %276, %269 : vector<8x48xf32>
    %cst_99 = arith.constant -0.284496725 : f32
    %278 = vector.broadcast %cst_99 : f32 to vector<8x48xf32>
    %279 = arith.addf %277, %278 : vector<8x48xf32>
    %280 = arith.mulf %279, %269 : vector<8x48xf32>
    %cst_100 = arith.constant 0.254829586 : f32
    %281 = vector.broadcast %cst_100 : f32 to vector<8x48xf32>
    %282 = arith.addf %280, %281 : vector<8x48xf32>
    %283 = arith.mulf %282, %269 : vector<8x48xf32>
    %cst_101 = arith.constant 0.000000e+00 : f32
    %284 = vector.broadcast %cst_101 : f32 to vector<8x48xf32>
    %285 = arith.subf %284, %263 : vector<8x48xf32>
    %286 = arith.mulf %285, %263 : vector<8x48xf32>
    %287 = math.exp %286 : vector<8x48xf32>
    %288 = arith.mulf %283, %287 : vector<8x48xf32>
    %cst_102 = arith.constant 1.000000e+00 : f32
    %289 = vector.broadcast %cst_102 : f32 to vector<8x48xf32>
    %290 = arith.subf %289, %288 : vector<8x48xf32>
    %cst_103 = arith.constant 0.000000e+00 : f32
    %291 = vector.broadcast %cst_103 : f32 to vector<8x48xf32>
    %292 = arith.cmpf oge, %262, %291 : vector<8x48xf32>
    %cst_104 = arith.constant 0.000000e+00 : f32
    %293 = vector.broadcast %cst_104 : f32 to vector<8x48xf32>
    %294 = arith.subf %293, %290 : vector<8x48xf32>
    %295 = arith.select %292, %290, %294 : vector<8x48xi1>, vector<8x48xf32>
    %cst_105 = arith.constant 1.000000e+00 : f32
    %296 = vector.broadcast %cst_105 : f32 to vector<8x48xf32>
    %297 = arith.addf %296, %295 : vector<8x48xf32>
    %298 = arith.mulf %260, %297 : vector<8x48xf32>
    %c0_106 = arith.constant 0 : index
    %c264 = arith.constant 264 : index
    %299 = vector.load %arg3[%c0_106, %c264] : memref<48x456xf32, #tpu.memory_space<vmem>>, vector<48x128xf32>
    %cst_107 = arith.constant dense<0.000000e+00> : vector<8x128xf32>
    %300 = tpu.matmul %298, %299, %cst_107 {dimension_numbers = #tpu.dot_dimension_numbers<[1], [0], [0], [1], [0, 0, 1, 1], [], []>} : vector<8x48xf32>, vector<48x128xf32>, vector<8x128xf32> -> vector<8x128xf32>
    %c0_108 = arith.constant 0 : index
    %c1800 = arith.constant 1800 : index
    %301 = vector.load %arg4[%c0_108, %c1800] : memref<1x1928xf32, #tpu.memory_space<vmem>>, vector<1x128xf32>
    %302 = vector.broadcast %301 : vector<1x128xf32> to vector<8x128xf32>
    %303 = arith.addf %300, %302 : vector<8x128xf32>
    %304 = vector.extract_strided_slice %303 {offsets = [0, 0], sizes = [8, 64], strides = [1, 1]} : vector<8x128xf32> to vector<8x64xf32>
    %305 = vector.extract_strided_slice %303 {offsets = [0, 64], sizes = [8, 64], strides = [1, 1]} : vector<8x128xf32> to vector<8x64xf32>
    %cst_109 = arith.constant 5.000000e-01 : f32
    %306 = vector.broadcast %cst_109 : f32 to vector<8x64xf32>
    %307 = arith.mulf %306, %305 : vector<8x64xf32>
    %308 = math.exp %307 : vector<8x64xf32>
    %309 = arith.mulf %3, %308 : vector<8x64xf32>
    %310 = arith.addf %309, %304 : vector<8x64xf32>
    %c0_110 = arith.constant 0 : index
    %c0_111 = arith.constant 0 : index
    %311 = vector.load %arg5[%c0_110, %c0_111] : memref<8x64xf32, #tpu.memory_space<vmem>>, vector<8x64xf32>
    tpu.vector_store %arg5[%c0_110, %c0_111], %310 {strides = array<i32>} : memref<8x64xf32, #tpu.memory_space<vmem>>, vector<8x64xf32>,
    return
  }
}

</mosaic_0001>

<llo_original>
// kernel: fcvae_forward.1
$region0: #{fcvae_forward.1}
  #allocation0 [shape = 'u32[]', space=smem, size = 0x4, offset = 0x4, fixed_abs, tag = 'smem constant byte address 0x4 - core index']
  #allocation1 [shape = 'u32[72,128]{1,0:T(1,128)}', space=vmem, size = 0x9000, scoped, tag = 'internal scratch']
  %s0 = inlined_call_operand.hbm [shape: f32[8,64], index: 0, kind: input, shape index: {}]
  %s1 = inlined_call_operand.hbm [shape: f32[8,92], index: 1, kind: input, shape index: {}]
  %s2 = inlined_call_operand.hbm [shape: f32[64,2192], index: 2, kind: input, shape index: {}]
  %s3 = inlined_call_operand.hbm [shape: f32[48,456], index: 3, kind: input, shape index: {}]
  %s4 = inlined_call_operand.hbm [shape: f32[1,1928], index: 4, kind: input, shape index: {}]
  %s5 = inlined_call_operand.hbm [shape: f32[8,64], index: 5, kind: output, shape index: {}]
  %s6 = sld [smem:[#allocation0]]
  $region50: #{fcvae_forward.1} parent=0
    _
  %s8 = ssub.s32 1, %s6
  %s9 = scalar_select 0, %s8, %s6
  $region1: #{fcvae_forward.1} parent=0
    #allocation2 [shape = 'u8[4096]{0}', space=vmem, size = 0x1000, scoped, tag = 'input window, operand 0, single buffered']
    #allocation3 [shape = 's32[1]{0}', space=sflag, size = 0x4, scoped, tag = 'scoped memory for fcvae_forward.1']
    #allocation4 [shape = 's32[1]{0}', space=sflag, size = 0x4, scoped, tag = 'scoped memory for fcvae_forward.1']
    #allocation5 [shape = 'u8[4096]{0}', space=vmem, size = 0x1000, scoped, tag = 'input window, operand 1, single buffered']
    #allocation6 [shape = 's32[1]{0}', space=sflag, size = 0x4, scoped, tag = 'scoped memory for fcvae_forward.1']
    #allocation7 [shape = 'u8[589824]{0}', space=vmem, size = 0x90000, scoped, tag = 'input window, operand 2, single buffered']
    #allocation8 [shape = 'u8[98304]{0}', space=vmem, size = 0x18000, scoped, tag = 'input window, operand 3, single buffered']
    #allocation9 [shape = 's32[1]{0}', space=sflag, size = 0x4, scoped, tag = 'scoped memory for fcvae_forward.1']
    #allocation10 [shape = 'u8[8192]{0}', space=vmem, size = 0x2000, scoped, tag = 'input window, operand 4, single buffered']
    #allocation11 [shape = 'u8[4096]{0}', space=vmem, size = 0x1000, scoped, tag = 'output window, operand 0, single buffered']
    %10 = vsyncpa [#allocation3], 0
    %11 = vsyncpa [#allocation6], 0
    %12 = vsyncpa [#allocation9], 0
    %13 = vsyncpa [#allocation4], 0
    // Predicated region
    $region2: #{fcvae_forward.1} parent=1 // pred_check
      _
    $region3: #{fcvae_forward.1} parent=1 // pred_check_branch
      %15 = sbr.rel (0) target = $region5
    $region4: #{fcvae_forward.1} parent=1 // pred_region
      %17 = vsyncadd [#allocation3], 0
      %s19 = sshll.u32 %s0, 4
      %s20 = int_to_ptr.hbm [resolvable:$true] %s19
      %s21 = sshll.u32 [#allocation2], 4
      %s22 = int_to_ptr.vmem [resolvable:$true] %s21
      %24 = dma.hbm_to_vmem [thread:$0]  %s20, 128, %s22, [#allocation3]
    $region5: #{fcvae_forward.1} parent=1 // pred_fallthru
      _
    // Predicated region
    $region6: #{fcvae_forward.1} parent=1 // pred_check
      _
    $region7: #{fcvae_forward.1} parent=1 // pred_check_branch
      %26 = sbr.rel (0) target = $region9
    $region8: #{fcvae_forward.1} parent=1 // pred_region
      %28 = vsyncadd [#allocation6], 0
      %s30 = sshll.u32 %s1, 4
      %s31 = int_to_ptr.hbm [resolvable:$true] %s30
      %s32 = sshll.u32 [#allocation5], 4
      %s33 = int_to_ptr.vmem [resolvable:$true] %s32
      %35 = dma.hbm_to_vmem [thread:$0]  %s31, 128, %s33, [#allocation6]
    $region9: #{fcvae_forward.1} parent=1 // pred_fallthru
      _
    // Predicated region
    $region10: #{fcvae_forward.1} parent=1 // pred_check
      _
    $region11: #{fcvae_forward.1} parent=1 // pred_check_branch
      %37 = sbr.rel (0) target = $region13
    $region12: #{fcvae_forward.1} parent=1 // pred_region
      %39 = vsyncadd [#allocation6], 0
      %s40 = sshll.u32 %s2, 4
      %s41 = int_to_ptr.hbm [resolvable:$true] %s40
      %s42 = sshll.u32 [#allocation7], 4
      %s43 = int_to_ptr.vmem [resolvable:$true] %s42
      %48 = dma.hbm_to_vmem [thread:$0]  %s41, 18432, %s43, [#allocation6], 2304, 2304, 144
    $region13: #{fcvae_forward.1} parent=1 // pred_fallthru
      _
    // Predicated region
    $region14: #{fcvae_forward.1} parent=1 // pred_check
      _
    $region15: #{fcvae_forward.1} parent=1 // pred_check_branch
      %50 = sbr.rel (0) target = $region17
    $region16: #{fcvae_forward.1} parent=1 // pred_region
      %52 = vsyncadd [#allocation9], 0
      %s53 = sshll.u32 %s3, 4
      %s54 = int_to_ptr.hbm [resolvable:$true] %s53
      %s55 = sshll.u32 [#allocation8], 4
      %s56 = int_to_ptr.vmem [resolvable:$true] %s55
      %61 = dma.hbm_to_vmem [thread:$0]  %s54, 3072, %s56, [#allocation9], 512, 512, 32
    $region17: #{fcvae_forward.1} parent=1 // pred_fallthru
      _
    // Predicated region
    $region18: #{fcvae_forward.1} parent=1 // pred_check
      _
    $region19: #{fcvae_forward.1} parent=1 // pred_check_branch
      %63 = sbr.rel (0) target = $region21
    $region20: #{fcvae_forward.1} parent=1 // pred_region
      %65 = vsyncadd [#allocation9], 0
      %s67 = sshll.u32 %s4, 4
      %s68 = int_to_ptr.hbm [resolvable:$true] %s67
      %s69 = sshll.u32 [#allocation10], 4
      %s70 = int_to_ptr.vmem [resolvable:$true] %s69
      %72 = dma.hbm_to_vmem [thread:$0]  %s68, 256, %s70, [#allocation9]
    $region21: #{fcvae_forward.1} parent=1 // pred_fallthru
      _
    // Predicated region
    $region22: #{fcvae_forward.1} parent=1 // pred_check
      _
    $region23: #{fcvae_forward.1} parent=1 // pred_check_branch
      %74 = sbr.rel (0) target = $region25
    $region24: #{fcvae_forward.1} parent=1 // pred_region
      %76 = dma.done [#allocation3], 128
    $region25: #{fcvae_forward.1} parent=1 // pred_fallthru
      _
    // Predicated region
    $region26: #{fcvae_forward.1} parent=1 // pred_check
      _
    $region27: #{fcvae_forward.1} parent=1 // pred_check_branch
      %78 = sbr.rel (0) target = $region29
    $region28: #{fcvae_forward.1} parent=1 // pred_region
      %80 = dma.done [#allocation6], 128
    $region29: #{fcvae_forward.1} parent=1 // pred_fallthru
      _
    // Predicated region
    $region30: #{fcvae_forward.1} parent=1 // pred_check
      _
    $region31: #{fcvae_forward.1} parent=1 // pred_check_branch
      %82 = sbr.rel (0) target = $region33
    $region32: #{fcvae_forward.1} parent=1 // pred_region
      %84 = dma.done [#allocation6], 18432
    $region33: #{fcvae_forward.1} parent=1 // pred_fallthru
      _
    // Predicated region
    $region34: #{fcvae_forward.1} parent=1 // pred_check
      _
    $region35: #{fcvae_forward.1} parent=1 // pred_check_branch
      %86 = sbr.rel (0) target = $region37
    $region36: #{fcvae_forward.1} parent=1 // pred_region
      %88 = dma.done [#allocation9], 3072
    $region37: #{fcvae_forward.1} parent=1 // pred_fallthru
      _
    // Predicated region
    $region38: #{fcvae_forward.1} parent=1 // pred_check
      _
    $region39: #{fcvae_forward.1} parent=1 // pred_check_branch
      %90 = sbr.rel (0) target = $region41
    $region40: #{fcvae_forward.1} parent=1 // pred_region
      %92 = dma.done [#allocation9], 256
    $region41: #{fcvae_forward.1} parent=1 // pred_fallthru
      _
    %v93 = vld [vmem:[#allocation2] sm:$0xff]
    %v94 = vld [vmem:[#allocation5] sm:$0xff]
    %v95 = vld [vmem:[#allocation7] sm:$0xff]
    %v96 = vld [vmem:[#allocation7 + $0x90] sm:$0xff]
    %v97 = vld [vmem:[#allocation7 + $0x120] sm:$0xff]
    %v98 = vld [vmem:[#allocation7 + $0x1b0] sm:$0xff]
    %v99 = vld [vmem:[#allocation7 + $0x240] sm:$0xff]
    %v100 = vld [vmem:[#allocation7 + $0x2d0] sm:$0xff]
    %v101 = vld [vmem:[#allocation7 + $0x360] sm:$0xff]
    %v102 = vld [vmem:[#allocation7 + $0x3f0] sm:$0xff]
    %v103 = vld [vmem:[#allocation10] sm:$0x1]
    %v105 = vperm.slane %v103, 0
    %vm107 = vcmask 523264
    %v109 = vsel %vm107, %v93, 0
    %111 = vmatpush.msra.mxu0 0.0
    %112 = vmatpush.msra.mxu0 0.0
    %113 = vmatpush.msra.mxu0 0.0
    %114 = vmatpush.msra.mxu0 0.0
    %115 = vmatpush.msra.mxu0 0.0
    %116 = vmatpush.msra.mxu0 0.0
    %117 = vmatpush.msra.mxu0 0.0
    %118 = vmatpush.msra.mxu0 0.0
    %119 = vmatpush.msra.mxu0 %v102
    %120 = vmatpush.msra.mxu0 %v101
    %121 = vmatpush.msra.mxu0 %v100
    %122 = vmatpush.msra.mxu0 %v99
    %123 = vmatpush.msra.mxu0 %v98
    %124 = vmatpush.msra.mxu0 %v97
    %125 = vmatpush.msra.mxu0 %v96
    %126 = vmatpush.msra.mxu0 %v95
    %127 = vmatmul.f32.gmra.mxu0 %v109
    %v128 = vpop.f32.mrf.mxu0
    %v129 = vadd.f32 %v105, %v128
    %130 = vdwg.mxu0
    %v131 = vmax.f32 %v129, 0.0
    %133 = vrot.lane.b32.xlu0 %v94, 64
    %v134 = vpop.permute.xlu0 %133
    %v136 = vmul.f32 %v131, %v134
    %v137 = vld [vmem:[#allocation7 + $0x8] sm:$0xff]
    %v138 = vld [vmem:[#allocation7 + $0x10] sm:$0xff]
    %v139 = vld [vmem:[#allocation7 + $0x18] sm:$0xff]
    %v140 = vld [vmem:[#allocation7 + $0x20] sm:$0xff]
    %v141 = vld [vmem:[#allocation7 + $0x28] sm:$0xff]
    %v142 = vld [vmem:[#allocation7 + $0x30] sm:$0xff]
    %v143 = vld [vmem:[#allocation7 + $0x38] sm:$0xff]
    %v144 = vld [vmem:[#allocation7 + $0x40] sm:$0xff]
    %v145 = vld [vmem:[#allocation7 + $0x48] sm:$0xff]
    %v146 = vld [vmem:[#allocation7 + $0x50] sm:$0xff]
    %v147 = vld [vmem:[#allocation7 + $0x58] sm:$0xff]
    %v148 = vld [vmem:[#allocation7 + $0x60] sm:$0xff]
    %v149 = vld [vmem:[#allocation7 + $0x98] sm:$0xff]
    %v150 = vld [vmem:[#allocation7 + $0xa0] sm:$0xff]
    %v151 = vld [vmem:[#allocation7 + $0xa8] sm:$0xff]
    %v152 = vld [vmem:[#allocation7 + $0xb0] sm:$0xff]
    %v153 = vld [vmem:[#allocation7 + $0xb8] sm:$0xff]
    %v154 = vld [vmem:[#allocation7 + $0xc0] sm:$0xff]
    %v155 = vld [vmem:[#allocation7 + $0xc8] sm:$0xff]
    %v156 = vld [vmem:[#allocation7 + $0xd0] sm:$0xff]
    %v157 = vld [vmem:[#allocation7 + $0xd8] sm:$0xff]
    %v158 = vld [vmem:[#allocation7 + $0xe0] sm:$0xff]
    %v159 = vld [vmem:[#allocation7 + $0xe8] sm:$0xff]
    %v160 = vld [vmem:[#allocation7 + $0xf0] sm:$0xff]
    %v161 = vld [vmem:[#allocation7 + $0x128] sm:$0xff]
    %v162 = vld [vmem:[#allocation7 + $0x130] sm:$0xff]
    %v163 = vld [vmem:[#allocation7 + $0x138] sm:$0xff]
    %v164 = vld [vmem:[#allocation7 + $0x140] sm:$0xff]
    %v165 = vld [vmem:[#allocation7 + $0x148] sm:$0xff]
    %v166 = vld [vmem:[#allocation7 + $0x150] sm:$0xff]
    %v167 = vld [vmem:[#allocation7 + $0x158] sm:$0xff]
    %v168 = vld [vmem:[#allocation7 + $0x160] sm:$0xff]
    %v169 = vld [vmem:[#allocation7 + $0x168] sm:$0xff]
    %v170 = vld [vmem:[#allocation7 + $0x170] sm:$0xff]
    %v171 = vld [vmem:[#allocation7 + $0x178] sm:$0xff]
    %v172 = vld [vmem:[#allocation7 + $0x180] sm:$0xff]
    %v173 = vld [vmem:[#allocation7 + $0x1b8] sm:$0xff]
    %v174 = vld [vmem:[#allocation7 + $0x1c0] sm:$0xff]
    %v175 = vld [vmem:[#allocation7 + $0x1c8] sm:$0xff]
    %v176 = vld [vmem:[#allocation7 + $0x1d0] sm:$0xff]
    %v177 = vld [vmem:[#allocation7 + $0x1d8] sm:$0xff]
    %v178 = vld [vmem:[#allocation7 + $0x1e0] sm:$0xff]
    %v179 = vld [vmem:[#allocation7 + $0x1e8] sm:$0xff]
    %v180 = vld [vmem:[#allocation7 + $0x1f0] sm:$0xff]
    %v181 = vld [vmem:[#allocation7 + $0x1f8] sm:$0xff]
    %v182 = vld [vmem:[#allocation7 + $0x200] sm:$0xff]
    %v183 = vld [vmem:[#allocation7 + $0x208] sm:$0xff]
    %v184 = vld [vmem:[#allocation7 + $0x210] sm:$0xff]
    %v185 = vld [vmem:[#allocation7 + $0x248] sm:$0xff]
    %v186 = vld [vmem:[#allocation7 + $0x250] sm:$0xff]
    %v187 = vld [vmem:[#allocation7 + $0x258] sm:$0xff]
    %v188 = vld [vmem:[#allocation7 + $0x260] sm:$0xff]
    %v189 = vld [vmem:[#allocation7 + $0x268] sm:$0xff]
    %v190 = vld [vmem:[#allocation7 + $0x270] sm:$0xff]
    %v191 = vld [vmem:[#allocation7 + $0x278] sm:$0xff]
    %v192 = vld [vmem:[#allocation7 + $0x280] sm:$0xff]
    %v193 = vld [vmem:[#allocation7 + $0x288] sm:$0xff]
    %v194 = vld [vmem:[#allocation7 + $0x290] sm:$0xff]
    %v195 = vld [vmem:[#allocation7 + $0x298] sm:$0xff]
    %v196 = vld [vmem:[#allocation7 + $0x2a0] sm:$0xff]
    %v197 = vld [vmem:[#allocation7 + $0x2d8] sm:$0xff]
    %v198 = vld [vmem:[#allocation7 + $0x2e0] sm:$0xff]
    %v199 = vld [vmem:[#allocation7 + $0x2e8] sm:$0xff]
    %v200 = vld [vmem:[#allocation7 + $0x2f0] sm:$0xff]
    %v201 = vld [vmem:[#allocation7 + $0x2f8] sm:$0xff]
    %v202 = vld [vmem:[#allocation7 + $0x300] sm:$0xff]
    %v203 = vld [vmem:[#allocation7 + $0x308] sm:$0xff]
    %v204 = vld [vmem:[#allocation7 + $0x310] sm:$0xff]
    %v205 = vld [vmem:[#allocation7 + $0x318] sm:$0xff]
    %v206 = vld [vmem:[#allocation7 + $0x320] sm:$0xff]
    %v207 = vld [vmem:[#allocation7 + $0x328] sm:$0xff]
    %v208 = vld [vmem:[#allocation7 + $0x330] sm:$0xff]
    %v209 = vld [vmem:[#allocation7 + $0x368] sm:$0xff]
    %v210 = vld [vmem:[#allocation7 + $0x370] sm:$0xff]
    %v211 = vld [vmem:[#allocation7 + $0x378] sm:$0xff]
    %v212 = vld [vmem:[#allocation7 + $0x380] sm:$0xff]
    %v213 = vld [vmem:[#allocation7 + $0x388] sm:$0xff]
    %v214 = vld [vmem:[#allocation7 + $0x390] sm:$0xff]
    %v215 = vld [vmem:[#allocation7 + $0x398] sm:$0xff]
    %v216 = vld [vmem:[#allocation7 + $0x3a0] sm:$0xff]
    %v217 = vld [vmem:[#allocation7 + $0x3a8] sm:$0xff]
    %v218 = vld [vmem:[#allocation7 + $0x3b0] sm:$0xff]
    %v219 = vld [vmem:[#allocation7 + $0x3b8] sm:$0xff]
    %v220 = vld [vmem:[#allocation7 + $0x3c0] sm:$0xff]
    %v221 = vld [vmem:[#allocation7 + $0x3f8] sm:$0xff]
    %v222 = vld [vmem:[#allocation7 + $0x400] sm:$0xff]
    %v223 = vld [vmem:[#allocation7 + $0x408] sm:$0xff]
    %v224 = vld [vmem:[#allocation7 + $0x410] sm:$0xff]
    %v225 = vld [vmem:[#allocation7 + $0x418] sm:$0xff]
    %v226 = vld [vmem:[#allocation7 + $0x420] sm:$0xff]
    %v227 = vld [vmem:[#allocation7 + $0x428] sm:$0xff]
    %v228 = vld [vmem:[#allocation7 + $0x430] sm:$0xff]
    %v229 = vld [vmem:[#allocation7 + $0x438] sm:$0xff]
    %v230 = vld [vmem:[#allocation7 + $0x440] sm:$0xff]
    %v231 = vld [vmem:[#allocation7 + $0x448] sm:$0xff]
    %v232 = vld [vmem:[#allocation7 + $0x450] sm:$0xff]
    %v233 = vld [vmem:[#allocation10 + $0x1] sm:$0xff]
    %v234 = vld [vmem:[#allocation10 + $0x9] sm:$0xf]
    %v237 = vperm.slane %v233, 0
    %v238 = vperm.slane %v233, 1
    %v239 = vperm.slane %v233, 2
    %v240 = vperm.slane %v233, 3
    %v241 = vperm.slane %v233, 4
    %v242 = vperm.slane %v233, 5
    %v243 = vperm.slane %v233, 6
    %v244 = vperm.slane %v233, 7
    %v245 = vperm.slane %v234, 0
    %v246 = vperm.slane %v234, 1
    %v247 = vperm.slane %v234, 2
    %v248 = vperm.slane %v234, 3
    %v262 = vsel %vm107, %v129, 0
    %264 = vmatpush.msra.mxu0 0.0
    %265 = vmatpush.msra.mxu0 0.0
    %266 = vmatpush.msra.mxu0 0.0
    %267 = vmatpush.msra.mxu0 0.0
    %268 = vmatpush.msra.mxu0 0.0
    %269 = vmatpush.msra.mxu0 0.0
    %270 = vmatpush.msra.mxu0 0.0
    %271 = vmatpush.msra.mxu0 0.0
    %272 = vmatpush.msra.mxu0 %v221
    %273 = vmatpush.msra.mxu0 %v209
    %274 = vmatpush.msra.mxu0 %v197
    %275 = vmatpush.msra.mxu0 %v185
    %276 = vmatpush.msra.mxu0 %v173
    %277 = vmatpush.msra.mxu0 %v161
    %278 = vmatpush.msra.mxu0 %v149
    %279 = vmatpush.msra.mxu0 %v137
    %280 = vmatmul.f32.gmra.mxu0 %v262
    %v281 = vpop.f32.mrf.mxu0
    %v282 = vadd.f32 %v237, %v281
    %283 = vdwg.mxu0
    %284 = vmatpush.msra.mxu0 0.0
    %285 = vmatpush.msra.mxu0 0.0
    %286 = vmatpush.msra.mxu0 0.0
    %287 = vmatpush.msra.mxu0 0.0
    %288 = vmatpush.msra.mxu0 0.0
    %289 = vmatpush.msra.mxu0 0.0
    %290 = vmatpush.msra.mxu0 0.0
    %291 = vmatpush.msra.mxu0 0.0
    %292 = vmatpush.msra.mxu0 %v222
    %293 = vmatpush.msra.mxu0 %v210
    %294 = vmatpush.msra.mxu0 %v198
    %295 = vmatpush.msra.mxu0 %v186
    %296 = vmatpush.msra.mxu0 %v174
    %297 = vmatpush.msra.mxu0 %v162
    %298 = vmatpush.msra.mxu0 %v150
    %299 = vmatpush.msra.mxu0 %v138
    %300 = vmatmul.f32.gmra.mxu0 %v262
    %v301 = vpop.f32.mrf.mxu0
    %v302 = vadd.f32 %v238, %v301
    %303 = vdwg.mxu0
    %304 = vmatpush.msra.mxu0 0.0
    %305 = vmatpush.msra.mxu0 0.0
    %306 = vmatpush.msra.mxu0 0.0
    %307 = vmatpush.msra.mxu0 0.0
    %308 = vmatpush.msra.mxu0 0.0
    %309 = vmatpush.msra.mxu0 0.0
    %310 = vmatpush.msra.mxu0 0.0
    %311 = vmatpush.msra.mxu0 0.0
    %312 = vmatpush.msra.mxu0 %v223
    %313 = vmatpush.msra.mxu0 %v211
    %314 = vmatpush.msra.mxu0 %v199
    %315 = vmatpush.msra.mxu0 %v187
    %316 = vmatpush.msra.mxu0 %v175
    %317 = vmatpush.msra.mxu0 %v163
    %318 = vmatpush.msra.mxu0 %v151
    %319 = vmatpush.msra.mxu0 %v139
    %320 = vmatmul.f32.gmra.mxu0 %v262
    %v321 = vpop.f32.mrf.mxu0
    %v322 = vadd.f32 %v239, %v321
    %323 = vdwg.mxu0
    %324 = vmatpush.msra.mxu0 0.0
    %325 = vmatpush.msra.mxu0 0.0
    %326 = vmatpush.msra.mxu0 0.0
    %327 = vmatpush.msra.mxu0 0.0
    %328 = vmatpush.msra.mxu0 0.0
    %329 = vmatpush.msra.mxu0 0.0
    %330 = vmatpush.msra.mxu0 0.0
    %331 = vmatpush.msra.mxu0 0.0
    %332 = vmatpush.msra.mxu0 %v224
    %333 = vmatpush.msra.mxu0 %v212
    %334 = vmatpush.msra.mxu0 %v200
    %335 = vmatpush.msra.mxu0 %v188
    %336 = vmatpush.msra.mxu0 %v176
    %337 = vmatpush.msra.mxu0 %v164
    %338 = vmatpush.msra.mxu0 %v152
    %339 = vmatpush.msra.mxu0 %v140
    %340 = vmatmul.f32.gmra.mxu0 %v262
    %v341 = vpop.f32.mrf.mxu0
    %v342 = vadd.f32 %v240, %v341
    %343 = vdwg.mxu0
    %344 = vmatpush.msra.mxu0 0.0
    %345 = vmatpush.msra.mxu0 0.0
    %346 = vmatpush.msra.mxu0 0.0
    %347 = vmatpush.msra.mxu0 0.0
    %348 = vmatpush.msra.mxu0 0.0
    %349 = vmatpush.msra.mxu0 0.0
    %350 = vmatpush.msra.mxu0 0.0
    %351 = vmatpush.msra.mxu0 0.0
    %352 = vmatpush.msra.mxu0 %v225
    %353 = vmatpush.msra.mxu0 %v213
    %354 = vmatpush.msra.mxu0 %v201
    %355 = vmatpush.msra.mxu0 %v189
    %356 = vmatpush.msra.mxu0 %v177
    %357 = vmatpush.msra.mxu0 %v165
    %358 = vmatpush.msra.mxu0 %v153
    %359 = vmatpush.msra.mxu0 %v141
    %360 = vmatmul.f32.gmra.mxu0 %v262
    %v361 = vpop.f32.mrf.mxu0
    %v362 = vadd.f32 %v241, %v361
    %363 = vdwg.mxu0
    %364 = vmatpush.msra.mxu0 0.0
    %365 = vmatpush.msra.mxu0 0.0
    %366 = vmatpush.msra.mxu0 0.0
    %367 = vmatpush.msra.mxu0 0.0
    %368 = vmatpush.msra.mxu0 0.0
    %369 = vmatpush.msra.mxu0 0.0
    %370 = vmatpush.msra.mxu0 0.0
    %371 = vmatpush.msra.mxu0 0.0
    %372 = vmatpush.msra.mxu0 %v226
    %373 = vmatpush.msra.mxu0 %v214
    %374 = vmatpush.msra.mxu0 %v202
    %375 = vmatpush.msra.mxu0 %v190
    %376 = vmatpush.msra.mxu0 %v178
    %377 = vmatpush.msra.mxu0 %v166
    %378 = vmatpush.msra.mxu0 %v154
    %379 = vmatpush.msra.mxu0 %v142
    %380 = vmatmul.f32.gmra.mxu0 %v262
    %v381 = vpop.f32.mrf.mxu0
    %v382 = vadd.f32 %v242, %v381
    %383 = vdwg.mxu0
    %384 = vmatpush.msra.mxu0 0.0
    %385 = vmatpush.msra.mxu0 0.0
    %386 = vmatpush.msra.mxu0 0.0
    %387 = vmatpush.msra.mxu0 0.0
    %388 = vmatpush.msra.mxu0 0.0
    %389 = vmatpush.msra.mxu0 0.0
    %390 = vmatpush.msra.mxu0 0.0
    %391 = vmatpush.msra.mxu0 0.0
    %392 = vmatpush.msra.mxu0 %v227
    %393 = vmatpush.msra.mxu0 %v215
    %394 = vmatpush.msra.mxu0 %v203
    %395 = vmatpush.msra.mxu0 %v191
    %396 = vmatpush.msra.mxu0 %v179
    %397 = vmatpush.msra.mxu0 %v167
    %398 = vmatpush.msra.mxu0 %v155
    %399 = vmatpush.msra.mxu0 %v143
    %400 = vmatmul.f32.gmra.mxu0 %v262
    %v401 = vpop.f32.mrf.mxu0
    %v402 = vadd.f32 %v243, %v401
    %403 = vdwg.mxu0
    %404 = vmatpush.msra.mxu0 0.0
    %405 = vmatpush.msra.mxu0 0.0
    %406 = vmatpush.msra.mxu0 0.0
    %407 = vmatpush.msra.mxu0 0.0
    %408 = vmatpush.msra.mxu0 0.0
    %409 = vmatpush.msra.mxu0 0.0
    %410 = vmatpush.msra.mxu0 0.0
    %411 = vmatpush.msra.mxu0 0.0
    %412 = vmatpush.msra.mxu0 %v228
    %413 = vmatpush.msra.mxu0 %v216
    %414 = vmatpush.msra.mxu0 %v204
    %415 = vmatpush.msra.mxu0 %v192
    %416 = vmatpush.msra.mxu0 %v180
    %417 = vmatpush.msra.mxu0 %v168
    %418 = vmatpush.msra.mxu0 %v156
    %419 = vmatpush.msra.mxu0 %v144
    %420 = vmatmul.f32.gmra.mxu0 %v262
    %v421 = vpop.f32.mrf.mxu0
    %v422 = vadd.f32 %v244, %v421
    %423 = vdwg.mxu0
    %424 = vmatpush.msra.mxu0 0.0
    %425 = vmatpush.msra.mxu0 0.0
    %426 = vmatpush.msra.mxu0 0.0
    %427 = vmatpush.msra.mxu0 0.0
    %428 = vmatpush.msra.mxu0 0.0
    %429 = vmatpush.msra.mxu0 0.0
    %430 = vmatpush.msra.mxu0 0.0
    %431 = vmatpush.msra.mxu0 0.0
    %432 = vmatpush.msra.mxu0 %v229
    %433 = vmatpush.msra.mxu0 %v217
    %434 = vmatpush.msra.mxu0 %v205
    %435 = vmatpush.msra.mxu0 %v193
    %436 = vmatpush.msra.mxu0 %v181
    %437 = vmatpush.msra.mxu0 %v169
    %438 = vmatpush.msra.mxu0 %v157
    %439 = vmatpush.msra.mxu0 %v145
    %440 = vmatmul.f32.gmra.mxu0 %v262
    %v441 = vpop.f32.mrf.mxu0
    %v442 = vadd.f32 %v245, %v441
    %443 = vdwg.mxu0
    %444 = vmatpush.msra.mxu0 0.0
    %445 = vmatpush.msra.mxu0 0.0
    %446 = vmatpush.msra.mxu0 0.0
    %447 = vmatpush.msra.mxu0 0.0
    %448 = vmatpush.msra.mxu0 0.0
    %449 = vmatpush.msra.mxu0 0.0
    %450 = vmatpush.msra.mxu0 0.0
    %451 = vmatpush.msra.mxu0 0.0
    %452 = vmatpush.msra.mxu0 %v230
    %453 = vmatpush.msra.mxu0 %v218
    %454 = vmatpush.msra.mxu0 %v206
    %455 = vmatpush.msra.mxu0 %v194
    %456 = vmatpush.msra.mxu0 %v182
    %457 = vmatpush.msra.mxu0 %v170
    %458 = vmatpush.msra.mxu0 %v158
    %459 = vmatpush.msra.mxu0 %v146
    %460 = vmatmul.f32.gmra.mxu0 %v262
    %v461 = vpop.f32.mrf.mxu0
    %v462 = vadd.f32 %v246, %v461
    %463 = vdwg.mxu0
    %464 = vmatpush.msra.mxu0 0.0
    %465 = vmatpush.msra.mxu0 0.0
    %466 = vmatpush.msra.mxu0 0.0
    %467 = vmatpush.msra.mxu0 0.0
    %468 = vmatpush.msra.mxu0 0.0
    %469 = vmatpush.msra.mxu0 0.0
    %470 = vmatpush.msra.mxu0 0.0
    %471 = vmatpush.msra.mxu0 0.0
    %472 = vmatpush.msra.mxu0 %v231
    %473 = vmatpush.msra.mxu0 %v219
    %474 = vmatpush.msra.mxu0 %v207
    %475 = vmatpush.msra.mxu0 %v195
    %476 = vmatpush.msra.mxu0 %v183
    %477 = vmatpush.msra.mxu0 %v171
    %478 = vmatpush.msra.mxu0 %v159
    %479 = vmatpush.msra.mxu0 %v147
    %480 = vmatmul.f32.gmra.mxu0 %v262
    %v481 = vpop.f32.mrf.mxu0
    %v482 = vadd.f32 %v247, %v481
    %483 = vdwg.mxu0
    %484 = vmatpush.msra.mxu0 0.0
    %485 = vmatpush.msra.mxu0 0.0
    %486 = vmatpush.msra.mxu0 0.0
    %487 = vmatpush.msra.mxu0 0.0
    %488 = vmatpush.msra.mxu0 0.0
    %489 = vmatpush.msra.mxu0 0.0
    %490 = vmatpush.msra.mxu0 0.0
    %491 = vmatpush.msra.mxu0 0.0
    %492 = vmatpush.msra.mxu0 %v232
    %493 = vmatpush.msra.mxu0 %v220
    %494 = vmatpush.msra.mxu0 %v208
    %495 = vmatpush.msra.mxu0 %v196
    %496 = vmatpush.msra.mxu0 %v184
    %497 = vmatpush.msra.mxu0 %v172
    %498 = vmatpush.msra.mxu0 %v160
    %499 = vmatpush.msra.mxu0 %v148
    %500 = vmatmul.f32.gmra.mxu0 %v262
    %v501 = vpop.f32.mrf.mxu0
    %v502 = vadd.f32 %v248, %v501
    %503 = vdwg.mxu0
    %v504 = vmul.f32 %v282, %v362
    %v505 = vmul.f32 %v302, %v382
    %v506 = vmul.f32 %v322, %v402
    %v507 = vmul.f32 %v342, %v422
    %509 = vrot.lane.b32.xlu0 %v504, 64
    %v510 = vpop.permute.xlu0 %509
    %v512 = vadd.f32 %v504, %v510
    %v513 = vadd.f32 %v512, %v505
    %515 = vrot.lane.b32.xlu0 %v505, 64
    %v516 = vpop.permute.xlu0 %515
    %v518 = vadd.f32 %v513, %v516
    %v519 = vadd.f32 %v518, %v506
    %521 = vrot.lane.b32.xlu0 %v506, 64
    %v522 = vpop.permute.xlu0 %521
    %v524 = vadd.f32 %v519, %v522
    %v525 = vadd.f32 %v524, %v507
    %527 = vrot.lane.b32.xlu0 %v507, 64
    %v528 = vpop.permute.xlu0 %527
    %v530 = vadd.f32 %v525, %v528
    %v531 = vld [vmem:[#allocation8 + $0x18] sm:$0xff]
    %533 = vrot.lane.b32.xlu0 %v530, 120
    %v534 = vpop.permute.xlu0 %533
    %v536 = vmax.f32 %v530, %v534
    %537 = vrot.lane.b32.xlu0 %v530, 112
    %v538 = vpop.permute.xlu0 %537
    %v540 = vmax.f32 %v536, %v538
    %541 = vrot.lane.b32.xlu0 %v530, 104
    %v542 = vpop.permute.xlu0 %541
    %v544 = vmax.f32 %v540, %v542
    %545 = vrot.lane.b32.xlu0 %v530, 96
    %v546 = vpop.permute.xlu0 %545
    %v548 = vmax.f32 %v544, %v546
    %549 = vrot.lane.b32.xlu0 %v530, 88
    %v550 = vpop.permute.xlu0 %549
    %v552 = vmax.f32 %v548, %v550
    %553 = vrot.lane.b32.xlu0 %v530, 80
    %v554 = vpop.permute.xlu0 %553
    %v556 = vmax.f32 %v552, %v554
    %557 = vrot.lane.b32.xlu0 %v530, 72
    %v558 = vpop.permute.xlu0 %557
    %v560 = vmax.f32 %v556, %v558
    %562 = vrot.lane.b32.xlu0 %v531, 120
    %v563 = vpop.permute.xlu0 %562
    %vm565 = vcmask 64512
    %v567 = vsel %vm565, %v560, 0
    %569 = vmatpush.msra.mxu0 0.0
    %570 = vmatpush.msra.mxu0 0.0
    %571 = vmatpush.msra.mxu0 0.0
    %572 = vmatpush.msra.mxu0 0.0
    %573 = vmatpush.msra.mxu0 0.0
    %574 = vmatpush.msra.mxu0 0.0
    %575 = vmatpush.msra.mxu0 0.0
    %576 = vmatpush.msra.mxu0 0.0
    %577 = vmatpush.msra.mxu0 0.0
    %578 = vmatpush.msra.mxu0 0.0
    %579 = vmatpush.msra.mxu0 0.0
    %580 = vmatpush.msra.mxu0 0.0
    %581 = vmatpush.msra.mxu0 0.0
    %582 = vmatpush.msra.mxu0 0.0
    %583 = vmatpush.msra.mxu0 0.0
    %584 = vmatpush.msra.mxu0 %v563
    %585 = vmatmul.f32.gmra.mxu0 %v567
    %v586 = vpop.f32.mrf.mxu0
    %v587 = vadd.f32 0.0, %v586
    %588 = vdwg.mxu0
    %v589 = vsub.f32 %v530, %v587
    %v590 = vmul.f32 %v589, 1.442695
    %v591 = vpow.pop %v590
    %593 = vrot.lane.b32.xlu0 %v591, 120
    %v594 = vpop.permute.xlu0 %593
    %v596 = vadd.f32 %v591, %v594
    %597 = vrot.lane.b32.xlu0 %v591, 112
    %v598 = vpop.permute.xlu0 %597
    %v600 = vadd.f32 %v596, %v598
    %601 = vrot.lane.b32.xlu0 %v591, 104
    %v602 = vpop.permute.xlu0 %601
    %v604 = vadd.f32 %v600, %v602
    %605 = vrot.lane.b32.xlu0 %v591, 96
    %v606 = vpop.permute.xlu0 %605
    %v608 = vadd.f32 %v604, %v606
    %609 = vrot.lane.b32.xlu0 %v591, 88
    %v610 = vpop.permute.xlu0 %609
    %v612 = vadd.f32 %v608, %v610
    %613 = vrot.lane.b32.xlu0 %v591, 80
    %v614 = vpop.permute.xlu0 %613
    %v616 = vadd.f32 %v612, %v614
    %617 = vrot.lane.b32.xlu0 %v591, 72
    %v618 = vpop.permute.xlu0 %617
    %v620 = vadd.f32 %v616, %v618
    %v622 = vsel %vm565, %v620, 0
    %624 = vmatpush.msra.mxu0 0.0
    %625 = vmatpush.msra.mxu0 0.0
    %626 = vmatpush.msra.mxu0 0.0
    %627 = vmatpush.msra.mxu0 0.0
    %628 = vmatpush.msra.mxu0 0.0
    %629 = vmatpush.msra.mxu0 0.0
    %630 = vmatpush.msra.mxu0 0.0
    %631 = vmatpush.msra.mxu0 0.0
    %632 = vmatpush.msra.mxu0 0.0
    %633 = vmatpush.msra.mxu0 0.0
    %634 = vmatpush.msra.mxu0 0.0
    %635 = vmatpush.msra.mxu0 0.0
    %636 = vmatpush.msra.mxu0 0.0
    %637 = vmatpush.msra.mxu0 0.0
    %638 = vmatpush.msra.mxu0 0.0
    %639 = vmatpush.msra.mxu0 %v563
    %640 = vmatmul.f32.gmra.mxu0 %v622
    %v641 = vpop.f32.mrf.mxu0
    %v642 = vadd.f32 0.0, %v641
    %643 = vdwg.mxu0
    %v644 = vrcp.pop %v642
    %v645 = vmul.f32 %v642, %v644
    %v646 = vsub.f32 1.0, %v645
    %v647 = vmul.f32 %v644, %v646
    %v648 = vadd.f32 %v644, %v647
    %vm649 = vweird.f32 %v642
    %vm650 = vweird.f32 %v644
    %vm651 = vmor %vm649, %vm650
    %v652 = vsel %vm651, %v644, %v648
    %v653 = vand.u32 2147483647, %v642
    %vm654 = vcmp.eq.f32.partialorder %v653, 8.507059e+37
    %v655 = vand.u32 %v642, 2147483648
    %v656 = vor.u32 1.1754944e-38, %v655
    %v657 = vsel %vm654, %v656, %v652
    %v658 = vmul.f32 %v591, %v657
    %v659 = vld [vmem:[#allocation7 + $0x68] sm:$0xff]
    %v660 = vld [vmem:[#allocation7 + $0x70] sm:$0xff]
    %v661 = vld [vmem:[#allocation7 + $0x78] sm:$0xff]
    %v662 = vld [vmem:[#allocation7 + $0x80] sm:$0xff]
    %v663 = vld [vmem:[#allocation7 + $0xf8] sm:$0xff]
    %v664 = vld [vmem:[#allocation7 + $0x100] sm:$0xff]
    %v665 = vld [vmem:[#allocation7 + $0x108] sm:$0xff]
    %v666 = vld [vmem:[#allocation7 + $0x110] sm:$0xff]
    %v667 = vld [vmem:[#allocation7 + $0x188] sm:$0xff]
    %v668 = vld [vmem:[#allocation7 + $0x190] sm:$0xff]
    %v669 = vld [vmem:[#allocation7 + $0x198] sm:$0xff]
    %v670 = vld [vmem:[#allocation7 + $0x1a0] sm:$0xff]
    %v671 = vld [vmem:[#allocation7 + $0x218] sm:$0xff]
    %v672 = vld [vmem:[#allocation7 + $0x220] sm:$0xff]
    %v673 = vld [vmem:[#allocation7 + $0x228] sm:$0xff]
    %v674 = vld [vmem:[#allocation7 + $0x230] sm:$0xff]
    %v675 = vld [vmem:[#allocation7 + $0x2a8] sm:$0xff]
    %v676 = vld [vmem:[#allocation7 + $0x2b0] sm:$0xff]
    %v677 = vld [vmem:[#allocation7 + $0x2b8] sm:$0xff]
    %v678 = vld [vmem:[#allocation7 + $0x2c0] sm:$0xff]
    %v679 = vld [vmem:[#allocation7 + $0x338] sm:$0xff]
    %v680 = vld [vmem:[#allocation7 + $0x340] sm:$0xff]
    %v681 = vld [vmem:[#allocation7 + $0x348] sm:$0xff]
    %v682 = vld [vmem:[#allocation7 + $0x350] sm:$0xff]
    %v683 = vld [vmem:[#allocation7 + $0x3c8] sm:$0xff]
    %v684 = vld [vmem:[#allocation7 + $0x3d0] sm:$0xff]
    %v685 = vld [vmem:[#allocation7 + $0x3d8] sm:$0xff]
    %v686 = vld [vmem:[#allocation7 + $0x3e0] sm:$0xff]
    %v687 = vld [vmem:[#allocation7 + $0x458] sm:$0xff]
    %v688 = vld [vmem:[#allocation7 + $0x460] sm:$0xff]
    %v689 = vld [vmem:[#allocation7 + $0x468] sm:$0xff]
    %v690 = vld [vmem:[#allocation7 + $0x470] sm:$0xff]
    %v692 = vsel %vm107, %v658, 0
    %694 = vmatpush.msra.mxu0 0.0
    %695 = vmatpush.msra.mxu0 0.0
    %696 = vmatpush.msra.mxu0 0.0
    %697 = vmatpush.msra.mxu0 0.0
    %698 = vmatpush.msra.mxu0 0.0
    %699 = vmatpush.msra.mxu0 0.0
    %700 = vmatpush.msra.mxu0 0.0
    %701 = vmatpush.msra.mxu0 0.0
    %702 = vmatpush.msra.mxu0 %v687
    %703 = vmatpush.msra.mxu0 %v683
    %704 = vmatpush.msra.mxu0 %v679
    %705 = vmatpush.msra.mxu0 %v675
    %706 = vmatpush.msra.mxu0 %v671
    %707 = vmatpush.msra.mxu0 %v667
    %708 = vmatpush.msra.mxu0 %v663
    %709 = vmatpush.msra.mxu0 %v659
    %710 = vmatmul.f32.gmra.mxu0 %v692
    %v711 = vpop.f32.mrf.mxu0
    %v712 = vadd.f32 0.0, %v711
    %713 = vdwg.mxu0
    %714 = vmatpush.msra.mxu0 0.0
    %715 = vmatpush.msra.mxu0 0.0
    %716 = vmatpush.msra.mxu0 0.0
    %717 = vmatpush.msra.mxu0 0.0
    %718 = vmatpush.msra.mxu0 0.0
    %719 = vmatpush.msra.mxu0 0.0
    %720 = vmatpush.msra.mxu0 0.0
    %721 = vmatpush.msra.mxu0 0.0
    %722 = vmatpush.msra.mxu0 %v688
    %723 = vmatpush.msra.mxu0 %v684
    %724 = vmatpush.msra.mxu0 %v680
    %725 = vmatpush.msra.mxu0 %v676
    %726 = vmatpush.msra.mxu0 %v672
    %727 = vmatpush.msra.mxu0 %v668
    %728 = vmatpush.msra.mxu0 %v664
    %729 = vmatpush.msra.mxu0 %v660
    %730 = vmatmul.f32.gmra.mxu0 %v692
    %v731 = vpop.f32.mrf.mxu0
    %v732 = vadd.f32 0.0, %v731
    %733 = vdwg.mxu0
    %734 = vmatpush.msra.mxu0 0.0
    %735 = vmatpush.msra.mxu0 0.0
    %736 = vmatpush.msra.mxu0 0.0
    %737 = vmatpush.msra.mxu0 0.0
    %738 = vmatpush.msra.mxu0 0.0
    %739 = vmatpush.msra.mxu0 0.0
    %740 = vmatpush.msra.mxu0 0.0
    %741 = vmatpush.msra.mxu0 0.0
    %742 = vmatpush.msra.mxu0 %v689
    %743 = vmatpush.msra.mxu0 %v685
    %744 = vmatpush.msra.mxu0 %v681
    %745 = vmatpush.msra.mxu0 %v677
    %746 = vmatpush.msra.mxu0 %v673
    %747 = vmatpush.msra.mxu0 %v669
    %748 = vmatpush.msra.mxu0 %v665
    %749 = vmatpush.msra.mxu0 %v661
    %750 = vmatmul.f32.gmra.mxu0 %v692
    %v751 = vpop.f32.mrf.mxu0
    %v752 = vadd.f32 0.0, %v751
    %753 = vdwg.mxu0
    %754 = vmatpush.msra.mxu0 0.0
    %755 = vmatpush.msra.mxu0 0.0
    %756 = vmatpush.msra.mxu0 0.0
    %757 = vmatpush.msra.mxu0 0.0
    %758 = vmatpush.msra.mxu0 0.0
    %759 = vmatpush.msra.mxu0 0.0
    %760 = vmatpush.msra.mxu0 0.0
    %761 = vmatpush.msra.mxu0 0.0
    %762 = vmatpush.msra.mxu0 %v690
    %763 = vmatpush.msra.mxu0 %v686
    %764 = vmatpush.msra.mxu0 %v682
    %765 = vmatpush.msra.mxu0 %v678
    %766 = vmatpush.msra.mxu0 %v674
    %767 = vmatpush.msra.mxu0 %v670
    %768 = vmatpush.msra.mxu0 %v666
    %769 = vmatpush.msra.mxu0 %v662
    %770 = vmatmul.f32.gmra.mxu0 %v692
    %v771 = vpop.f32.mrf.mxu0
    %v772 = vadd.f32 0.0, %v771
    %773 = vdwg.mxu0
    %v774 = vmul.f32 %v442, %v712
    %v775 = vmul.f32 %v462, %v732
    %v776 = vmul.f32 %v482, %v752
    %v777 = vmul.f32 %v502, %v772
    %779 = vrot.lane.b32.xlu0 %v774, 64
    %v780 = vpop.permute.xlu0 %779
    %v782 = vadd.f32 %v774, %v780
    %v783 = vadd.f32 %v782, %v775
    %785 = vrot.lane.b32.xlu0 %v775, 64
    %v786 = vpop.permute.xlu0 %785
    %v788 = vadd.f32 %v783, %v786
    %v789 = vadd.f32 %v788, %v776
    %791 = vrot.lane.b32.xlu0 %v776, 64
    %v792 = vpop.permute.xlu0 %791
    %v794 = vadd.f32 %v789, %v792
    %v795 = vadd.f32 %v794, %v777
    %797 = vrot.lane.b32.xlu0 %v777, 64
    %v798 = vpop.permute.xlu0 %797
    %v800 = vadd.f32 %v795, %v798
    %v801 = vld [vmem:[#allocation7 + $0x88] sm:$0xff]
    %v802 = vld [vmem:[#allocation7 + $0x118] sm:$0xff]
    %v803 = vld [vmem:[#allocation7 + $0x1a8] sm:$0xff]
    %v804 = vld [vmem:[#allocation7 + $0x238] sm:$0xff]
    %v805 = vld [vmem:[#allocation7 + $0x2c8] sm:$0xff]
    %v806 = vld [vmem:[#allocation7 + $0x358] sm:$0xff]
    %v807 = vld [vmem:[#allocation7 + $0x3e8] sm:$0xff]
    %v808 = vld [vmem:[#allocation7 + $0x478] sm:$0xff]
    %v809 = vld [vmem:[#allocation10 + $0xd] sm:$0x1]
    %v811 = vperm.slane %v809, 0
    %v814 = vsel %vm107, %v800, 0
    %816 = vmatpush.msra.mxu0 0.0
    %817 = vmatpush.msra.mxu0 0.0
    %818 = vmatpush.msra.mxu0 0.0
    %819 = vmatpush.msra.mxu0 0.0
    %820 = vmatpush.msra.mxu0 0.0
    %821 = vmatpush.msra.mxu0 0.0
    %822 = vmatpush.msra.mxu0 0.0
    %823 = vmatpush.msra.mxu0 0.0
    %824 = vmatpush.msra.mxu0 %v808
    %825 = vmatpush.msra.mxu0 %v807
    %826 = vmatpush.msra.mxu0 %v806
    %827 = vmatpush.msra.mxu0 %v805
    %828 = vmatpush.msra.mxu0 %v804
    %829 = vmatpush.msra.mxu0 %v803
    %830 = vmatpush.msra.mxu0 %v802
    %831 = vmatpush.msra.mxu0 %v801
    %832 = vmatmul.f32.gmra.mxu0 %v814
    %v833 = vpop.f32.mrf.mxu0
    %v834 = vadd.f32 %v811, %v833
    %835 = vdwg.mxu0
    %v836 = vmax.f32 %v834, 0.0
    %v837 = vld [vmem:[#allocation8] sm:$0xff]
    %v838 = vld [vmem:[#allocation8 + $0x20] sm:$0xff]
    %840 = vrot.lane.b32.xlu0 %v136, 64
    %v841 = vpop.permute.xlu0 %840
    %vm842 = vcmask 130048
    %v843 = vsel %vm842, %v841, 0
    %845 = vmatpush.msra.mxu0 0.0
    %846 = vmatpush.msra.mxu0 0.0
    %847 = vmatpush.msra.mxu0 0.0
    %848 = vmatpush.msra.mxu0 0.0
    %849 = vmatpush.msra.mxu0 0.0
    %850 = vmatpush.msra.mxu0 0.0
    %851 = vmatpush.msra.mxu0 0.0
    %852 = vmatpush.msra.mxu0 0.0
    %853 = vmatpush.msra.mxu0 0.0
    %854 = vmatpush.msra.mxu0 0.0
    %855 = vmatpush.msra.mxu0 0.0
    %856 = vmatpush.msra.mxu0 0.0
    %857 = vmatpush.msra.mxu0 0.0
    %858 = vmatpush.msra.mxu0 0.0
    %859 = vmatpush.msra.mxu0 %v838
    %860 = vmatpush.msra.mxu0 %v837
    %861 = vmatmul.f32.gmra.mxu0 %v843
    %v862 = vpop.f32.mrf.mxu0
    %v863 = vadd.f32 0.0, %v862
    %864 = vdwg.mxu0
    %866 = vrot.lane.b32.xlu0 %v863, 80
    %v867 = vpop.permute.xlu0 %866
    %v869 = vadd.f32 %v129, %v867
    %872 = vrot.lane.b32.xlu0 %v837, 80
    %v873 = vpop.permute.xlu0 %872
    %874 = vrot.lane.b32.xlu0 %v838, 80
    %v875 = vpop.permute.xlu0 %874
    %v879 = vsel %vm842, %v836, 0
    %881 = vmatpush.msra.mxu0 0.0
    %882 = vmatpush.msra.mxu0 0.0
    %883 = vmatpush.msra.mxu0 0.0
    %884 = vmatpush.msra.mxu0 0.0
    %885 = vmatpush.msra.mxu0 0.0
    %886 = vmatpush.msra.mxu0 0.0
    %887 = vmatpush.msra.mxu0 0.0
    %888 = vmatpush.msra.mxu0 0.0
    %889 = vmatpush.msra.mxu0 0.0
    %890 = vmatpush.msra.mxu0 0.0
    %891 = vmatpush.msra.mxu0 0.0
    %892 = vmatpush.msra.mxu0 0.0
    %893 = vmatpush.msra.mxu0 0.0
    %894 = vmatpush.msra.mxu0 0.0
    %895 = vmatpush.msra.mxu0 %v875
    %896 = vmatpush.msra.mxu0 %v873
    %897 = vmatmul.f32.gmra.mxu0 %v879
    %v898 = vpop.f32.mrf.mxu0
    %v899 = vadd.f32 0.0, %v898
    %900 = vdwg.mxu0
    %902 = vrot.lane.b32.xlu0 %v899, 80
    %v903 = vpop.permute.xlu0 %902
    %v905 = vadd.f32 %v869, %v903
    %v906 = vmul.f32 %v905, 0.5
    %v907 = vmul.f32 %v905, 0.70710677
    %v908 = vand.u32 2147483647, %v907
    %v909 = vmul.f32 %v908, 0.3275911
    %v910 = vadd.f32 %v909, 1.0
    %v911 = vrcp.pop %v910
    %v912 = vmul.f32 %v910, %v911
    %v913 = vsub.f32 1.0, %v912
    %v914 = vmul.f32 %v911, %v913
    %v915 = vadd.f32 %v911, %v914
    %vm916 = vweird.f32 %v910
    %vm917 = vweird.f32 %v911
    %vm918 = vmor %vm916, %vm917
    %v919 = vsel %vm918, %v911, %v915
    %v920 = vand.u32 2147483647, %v910
    %vm921 = vcmp.eq.f32.partialorder %v920, 8.507059e+37
    %v922 = vand.u32 %v910, 2147483648
    %v923 = vor.u32 1.1754944e-38, %v922
    %v924 = vsel %vm921, %v923, %v919
    %v925 = vmul.f32 1.0, %v924
    %v926 = vmul.f32 %v925, 1.0614054
    %v927 = vadd.f32 %v926, -1.4531521
    %v928 = vmul.f32 %v927, %v925
    %v929 = vadd.f32 %v928, 1.4214138
    %v930 = vmul.f32 %v929, %v925
    %v931 = vadd.f32 %v930, -0.28449672
    %v932 = vmul.f32 %v931, %v925
    %v933 = vadd.f32 %v932, 0.2548296
    %v934 = vmul.f32 %v933, %v925
    %v935 = vsub.f32 0.0, %v908
    %v936 = vmul.f32 %v935, %v908
    %v937 = vmul.f32 %v936, 1.442695
    %v938 = vpow.pop %v937
    %v939 = vmul.f32 %v934, %v938
    %v940 = vsub.f32 1.0, %v939
    %vm941 = vcmp.ge.f32.partialorder %v907, 0.0
    %v942 = vsub.f32 0.0, %v940
    %v943 = vsel %vm941, %v940, %v942
    %v944 = vadd.f32 %v943, 1.0
    %v945 = vmul.f32 %v906, %v944
    %v946 = vld [vmem:[#allocation8] sm:$0xff]
    %v947 = vld [vmem:[#allocation8 + $0x20] sm:$0xff]
    %v948 = vld [vmem:[#allocation8 + $0x40] sm:$0xff]
    %v949 = vld [vmem:[#allocation8 + $0x60] sm:$0xff]
    %v950 = vld [vmem:[#allocation8 + $0x80] sm:$0xff]
    %v951 = vld [vmem:[#allocation8 + $0xa0] sm:$0xff]
    %953 = vrot.lane.b32.xlu0 %v945, 48
    %v954 = vpop.permute.xlu0 %953
    %961 = vrot.lane.b32.xlu0 %v946, 32
    %v962 = vpop.permute.xlu0 %961
    %963 = vrot.lane.b32.xlu0 %v947, 32
    %v964 = vpop.permute.xlu0 %963
    %965 = vrot.lane.b32.xlu0 %v948, 32
    %v966 = vpop.permute.xlu0 %965
    %967 = vrot.lane.b32.xlu0 %v949, 32
    %v968 = vpop.permute.xlu0 %967
    %969 = vrot.lane.b32.xlu0 %v950, 32
    %v970 = vpop.permute.xlu0 %969
    %971 = vrot.lane.b32.xlu0 %v951, 32
    %v972 = vpop.permute.xlu0 %971
    %979 = vrot.lane.b32.xlu0 %v811, 112
    %v980 = vpop.permute.xlu0 %979
    %vm982 = vcmask 392192
    %v983 = vsel %vm982, %v954, 0
    %985 = vmatpush.msra.mxu0 0.0
    %986 = vmatpush.msra.mxu0 0.0
    %987 = vmatpush.msra.mxu0 0.0
    %988 = vmatpush.msra.mxu0 0.0
    %989 = vmatpush.msra.mxu0 0.0
    %990 = vmatpush.msra.mxu0 0.0
    %991 = vmatpush.msra.mxu0 0.0
    %992 = vmatpush.msra.mxu0 0.0
    %993 = vmatpush.msra.mxu0 0.0
    %994 = vmatpush.msra.mxu0 0.0
    %995 = vmatpush.msra.mxu0 %v972
    %996 = vmatpush.msra.mxu0 %v970
    %997 = vmatpush.msra.mxu0 %v968
    %998 = vmatpush.msra.mxu0 %v966
    %999 = vmatpush.msra.mxu0 %v964
    %1000 = vmatpush.msra.mxu0 %v962
    %1001 = vmatmul.f32.gmra.mxu0 %v983
    %v1002 = vpop.f32.mrf.mxu0
    %v1003 = vadd.f32 %v980, %v1002
    %1004 = vdwg.mxu0
    %v1005 = vmul.f32 %v1003, 0.5
    %v1006 = vmul.f32 %v1003, 0.70710677
    %v1007 = vand.u32 2147483647, %v1006
    %v1008 = vmul.f32 %v1007, 0.3275911
    %v1009 = vadd.f32 %v1008, 1.0
    %v1010 = vrcp.pop %v1009
    %v1011 = vmul.f32 %v1009, %v1010
    %v1012 = vsub.f32 1.0, %v1011
    %v1013 = vmul.f32 %v1010, %v1012
    %v1014 = vadd.f32 %v1010, %v1013
    %vm1015 = vweird.f32 %v1009
    %vm1016 = vweird.f32 %v1010
    %vm1017 = vmor %vm1015, %vm1016
    %v1018 = vsel %vm1017, %v1010, %v1014
    %v1019 = vand.u32 2147483647, %v1009
    %vm1020 = vcmp.eq.f32.partialorder %v1019, 8.507059e+37
    %v1021 = vand.u32 %v1009, 2147483648
    %v1022 = vor.u32 1.1754944e-38, %v1021
    %v1023 = vsel %vm1020, %v1022, %v1018
    %v1024 = vmul.f32 1.0, %v1023
    %v1025 = vmul.f32 %v1024, 1.0614054
    %v1026 = vadd.f32 %v1025, -1.4531521
    %v1027 = vmul.f32 %v1026, %v1024
    %v1028 = vadd.f32 %v1027, 1.4214138
    %v1029 = vmul.f32 %v1028, %v1024
    %v1030 = vadd.f32 %v1029, -0.28449672
    %v1031 = vmul.f32 %v1030, %v1024
    %v1032 = vadd.f32 %v1031, 0.2548296
    %v1033 = vmul.f32 %v1032, %v1024
    %v1034 = vsub.f32 0.0, %v1007
    %v1035 = vmul.f32 %v1034, %v1007
    %v1036 = vmul.f32 %v1035, 1.442695
    %v1037 = vpow.pop %v1036
    %v1038 = vmul.f32 %v1033, %v1037
    %v1039 = vsub.f32 1.0, %v1038
    %vm1040 = vcmp.ge.f32.partialorder %v1006, 0.0
    %v1041 = vsub.f32 0.0, %v1039
    %v1042 = vsel %vm1040, %v1039, %v1041
    %v1043 = vadd.f32 %v1042, 1.0
    %v1044 = vmul.f32 %v1005, %v1043
    %v1045 = vld [vmem:[#allocation8] sm:$0xff]
    %v1046 = vld [vmem:[#allocation8 + $0x8] sm:$0xff]
    %v1047 = vld [vmem:[#allocation8 + $0x20] sm:$0xff]
    %v1048 = vld [vmem:[#allocation8 + $0x28] sm:$0xff]
    %v1049 = vld [vmem:[#allocation8 + $0x40] sm:$0xff]
    %v1050 = vld [vmem:[#allocation8 + $0x48] sm:$0xff]
    %1057 = vrot.lane.b32.xlu0 %v1045, 8
    %v1058 = vpop.permute.xlu0 %1057
    %1059 = vrot.lane.b32.xlu0 %v1046, 8
    %v1060 = vpop.permute.xlu0 %1059
    %1061 = vrot.lane.b32.xlu0 %v1047, 8
    %v1062 = vpop.permute.xlu0 %1061
    %1063 = vrot.lane.b32.xlu0 %v1048, 8
    %v1064 = vpop.permute.xlu0 %1063
    %1065 = vrot.lane.b32.xlu0 %v1049, 8
    %v1066 = vpop.permute.xlu0 %1065
    %1067 = vrot.lane.b32.xlu0 %v1050, 8
    %v1068 = vpop.permute.xlu0 %1067
    %v1069 = vsel %vm565, %v1058, %v1060
    %v1070 = vsel %vm565, %v1062, %v1064
    %v1071 = vsel %vm565, %v1066, %v1068
    %1075 = vrot.lane.b32.xlu0 %v811, 88
    %v1076 = vpop.permute.xlu0 %1075
    %vm1078 = vcmask 195584
    %v1080 = vsel %vm1078, %v1044, 0
    %1082 = vmatpush.msra.mxu0 0.0
    %1083 = vmatpush.msra.mxu0 0.0
    %1084 = vmatpush.msra.mxu0 0.0
    %1085 = vmatpush.msra.mxu0 0.0
    %1086 = vmatpush.msra.mxu0 0.0
    %1087 = vmatpush.msra.mxu0 0.0
    %1088 = vmatpush.msra.mxu0 0.0
    %1089 = vmatpush.msra.mxu0 0.0
    %1090 = vmatpush.msra.mxu0 0.0
    %1091 = vmatpush.msra.mxu0 0.0
    %1092 = vmatpush.msra.mxu0 0.0
    %1093 = vmatpush.msra.mxu0 0.0
    %1094 = vmatpush.msra.mxu0 0.0
    %1095 = vmatpush.msra.mxu0 %v1071
    %1096 = vmatpush.msra.mxu0 %v1070
    %1097 = vmatpush.msra.mxu0 %v1069
    %1098 = vmatmul.f32.gmra.mxu0 %v1080
    %v1099 = vpop.f32.mrf.mxu0
    %v1100 = vadd.f32 %v1076, %v1099
    %1101 = vdwg.mxu0
    %v1102 = vmul.f32 %v1100, 0.5
    %v1103 = vmul.f32 %v1102, 1.442695
    %v1104 = vpow.pop %v1103
    %1106 = vrot.lane.b32.xlu0 %v1104, 4
    %v1107 = vpop.permute.xlu0 %1106
    %v1109 = vmul.f32 %v94, %v1107
    %1111 = vrot.lane.b32.xlu0 %v1100, 16
    %v1112 = vpop.permute.xlu0 %1111
    %v1114 = vadd.f32 %v1109, %v1112
    %v1115 = vld [vmem:[#allocation8 + $0x8] sm:$0xff]
    %v1116 = vld [vmem:[#allocation8 + $0x28] sm:$0xf]
    %v1117 = vld [vmem:[#allocation8 + $0x28] sm:$0xff]
    %1120 = vrot.lane.b32.xlu0 %v1115, 88
    %v1121 = vpop.permute.xlu0 %1120
    %1122 = vrot.lane.b32.xlu0 %v1117, 88
    %v1123 = vpop.permute.xlu0 %1122
    %1126 = vmatpush.msra.mxu0 0.0
    %1127 = vmatpush.msra.mxu0 0.0
    %1128 = vmatpush.msra.mxu0 0.0
    %1129 = vmatpush.msra.mxu0 0.0
    %1130 = vmatpush.msra.mxu0 0.0
    %1131 = vmatpush.msra.mxu0 0.0
    %1132 = vmatpush.msra.mxu0 0.0
    %1133 = vmatpush.msra.mxu0 0.0
    %1134 = vmatpush.msra.mxu0 0.0
    %1135 = vmatpush.msra.mxu0 0.0
    %1136 = vmatpush.msra.mxu0 0.0
    %1137 = vmatpush.msra.mxu0 0.0
    %1138 = vmatpush.msra.mxu0 0.0
    %1139 = vmatpush.msra.mxu0 0.0
    %1140 = vmatpush.msra.mxu0 %v1123
    %1141 = vmatpush.msra.mxu0 %v1121
    %1142 = vmatmul.f32.gmra.mxu0 %v843
    %v1143 = vpop.f32.mrf.mxu0
    %v1144 = vadd.f32 0.0, %v1143
    %1145 = vdwg.mxu0
    %1147 = vrot.lane.b32.xlu0 %v1114, 112
    %v1148 = vpop.permute.xlu0 %1147
    %1150 = vrot.lane.b32.xlu0 %v1115, 112
    %v1151 = vpop.permute.xlu0 %1150
    %1152 = vrot.lane.b32.xlu0 %v1116, 112
    %v1153 = vpop.permute.xlu0 %1152
    %vm1155 = vcmask 97280
    %v1156 = vsel %vm1155, %v1148, 0
    %vm1158 = vcmask 1043456
    %v1159 = vsel %vm1158, %v1153, 0
    %1161 = vmatpush.msra.mxu0 0.0
    %1162 = vmatpush.msra.mxu0 0.0
    %1163 = vmatpush.msra.mxu0 0.0
    %1164 = vmatpush.msra.mxu0 0.0
    %1165 = vmatpush.msra.mxu0 0.0
    %1166 = vmatpush.msra.mxu0 0.0
    %1167 = vmatpush.msra.mxu0 0.0
    %1168 = vmatpush.msra.mxu0 0.0
    %1169 = vmatpush.msra.mxu0 0.0
    %1170 = vmatpush.msra.mxu0 0.0
    %1171 = vmatpush.msra.mxu0 0.0
    %1172 = vmatpush.msra.mxu0 0.0
    %1173 = vmatpush.msra.mxu0 0.0
    %1174 = vmatpush.msra.mxu0 0.0
    %1175 = vmatpush.msra.mxu0 %v1159
    %1176 = vmatpush.msra.mxu0 %v1151
    %1177 = vmatmul.f32.gmra.mxu0 %v1156
    %v1178 = vpop.f32.mrf.mxu0
    %v1179 = vadd.f32 %v1144, %v1178
    %1180 = vdwg.mxu0
    %1181 = vrot.lane.b32.xlu0 %v1115, 64
    %v1182 = vpop.permute.xlu0 %1181
    %1183 = vrot.lane.b32.xlu0 %v1117, 64
    %v1184 = vpop.permute.xlu0 %1183
    %1187 = vmatpush.msra.mxu0 0.0
    %1188 = vmatpush.msra.mxu0 0.0
    %1189 = vmatpush.msra.mxu0 0.0
    %1190 = vmatpush.msra.mxu0 0.0
    %1191 = vmatpush.msra.mxu0 0.0
    %1192 = vmatpush.msra.mxu0 0.0
    %1193 = vmatpush.msra.mxu0 0.0
    %1194 = vmatpush.msra.mxu0 0.0
    %1195 = vmatpush.msra.mxu0 0.0
    %1196 = vmatpush.msra.mxu0 0.0
    %1197 = vmatpush.msra.mxu0 0.0
    %1198 = vmatpush.msra.mxu0 0.0
    %1199 = vmatpush.msra.mxu0 0.0
    %1200 = vmatpush.msra.mxu0 0.0
    %1201 = vmatpush.msra.mxu0 %v1184
    %1202 = vmatpush.msra.mxu0 %v1182
    %1203 = vmatmul.f32.gmra.mxu0 %v879
    %v1204 = vpop.f32.mrf.mxu0
    %v1205 = vadd.f32 0.0, %v1204
    %1206 = vdwg.mxu0
    %v1207 = vadd.f32 %v1179, %v1205
    %1208 = vrot.lane.b32.xlu0 %v811, 64
    %v1209 = vpop.permute.xlu0 %1208
    %v1211 = vadd.f32 %v1207, %v1209
    %v1212 = vmul.f32 %v1211, 0.5
    %v1213 = vmul.f32 %v1211, 0.70710677
    %v1214 = vand.u32 2147483647, %v1213
    %v1215 = vmul.f32 %v1214, 0.3275911
    %v1216 = vadd.f32 %v1215, 1.0
    %v1217 = vrcp.pop %v1216
    %v1218 = vmul.f32 %v1216, %v1217
    %v1219 = vsub.f32 1.0, %v1218
    %v1220 = vmul.f32 %v1217, %v1219
    %v1221 = vadd.f32 %v1217, %v1220
    %vm1222 = vweird.f32 %v1216
    %vm1223 = vweird.f32 %v1217
    %vm1224 = vmor %vm1222, %vm1223
    %v1225 = vsel %vm1224, %v1217, %v1221
    %v1226 = vand.u32 2147483647, %v1216
    %vm1227 = vcmp.eq.f32.partialorder %v1226, 8.507059e+37
    %v1228 = vand.u32 %v1216, 2147483648
    %v1229 = vor.u32 1.1754944e-38, %v1228
    %v1230 = vsel %vm1227, %v1229, %v1225
    %v1231 = vmul.f32 1.0, %v1230
    %v1232 = vmul.f32 %v1231, 1.0614054
    %v1233 = vadd.f32 %v1232, -1.4531521
    %v1234 = vmul.f32 %v1233, %v1231
    %v1235 = vadd.f32 %v1234, 1.4214138
    %v1236 = vmul.f32 %v1235, %v1231
    %v1237 = vadd.f32 %v1236, -0.28449672
    %v1238 = vmul.f32 %v1237, %v1231
    %v1239 = vadd.f32 %v1238, 0.2548296
    %v1240 = vmul.f32 %v1239, %v1231
    %v1241 = vsub.f32 0.0, %v1214
    %v1242 = vmul.f32 %v1241, %v1214
    %v1243 = vmul.f32 %v1242, 1.442695
    %v1244 = vpow.pop %v1243
    %v1245 = vmul.f32 %v1240, %v1244
    %v1246 = vsub.f32 1.0, %v1245
    %vm1247 = vcmp.ge.f32.partialorder %v1213, 0.0
    %v1248 = vsub.f32 0.0, %v1246
    %v1249 = vsel %vm1247, %v1246, %v1248
    %v1250 = vadd.f32 %v1249, 1.0
    %v1251 = vmul.f32 %v1212, %v1250
    %v1252 = vld [vmem:[#allocation8 + $0x8] sm:$0xff]
    %v1253 = vld [vmem:[#allocation8 + $0x10] sm:$0xff]
    %v1254 = vld [vmem:[#allocation8 + $0x28] sm:$0xff]
    %v1255 = vld [vmem:[#allocation8 + $0x30] sm:$0xff]
    %v1256 = vld [vmem:[#allocation8 + $0x48] sm:$0xff]
    %v1257 = vld [vmem:[#allocation8 + $0x50] sm:$0xff]
    %v1258 = vld [vmem:[#allocation10 + $0xd] sm:$0x3]
    %v1260 = vperm.slane %v1258, 0
    %v1261 = vperm.slane %v1258, 1
    %1268 = vrot.lane.b32.xlu0 %v1252, 40
    %v1269 = vpop.permute.xlu0 %1268
    %1270 = vrot.lane.b32.xlu0 %v1253, 40
    %v1271 = vpop.permute.xlu0 %1270
    %1272 = vrot.lane.b32.xlu0 %v1254, 40
    %v1273 = vpop.permute.xlu0 %1272
    %1274 = vrot.lane.b32.xlu0 %v1255, 40
    %v1275 = vpop.permute.xlu0 %1274
    %1276 = vrot.lane.b32.xlu0 %v1256, 40
    %v1277 = vpop.permute.xlu0 %1276
    %1278 = vrot.lane.b32.xlu0 %v1257, 40
    %v1279 = vpop.permute.xlu0 %1278
    %vm1280 = vcmask 326656
    %v1281 = vsel %vm1280, %v1269, %v1271
    %v1282 = vsel %vm1280, %v1273, %v1275
    %v1283 = vsel %vm1280, %v1277, %v1279
    %1287 = vrot.lane.b32.xlu0 %v1260, 40
    %v1288 = vpop.permute.xlu0 %1287
    %1289 = vrot.lane.b32.xlu0 %v1261, 40
    %v1290 = vpop.permute.xlu0 %1289
    %v1291 = vsel %vm1280, %v1288, %v1290
    %v1294 = vsel %vm1078, %v1251, 0
    %1296 = vmatpush.msra.mxu0 0.0
    %1297 = vmatpush.msra.mxu0 0.0
    %1298 = vmatpush.msra.mxu0 0.0
    %1299 = vmatpush.msra.mxu0 0.0
    %1300 = vmatpush.msra.mxu0 0.0
    %1301 = vmatpush.msra.mxu0 0.0
    %1302 = vmatpush.msra.mxu0 0.0
    %1303 = vmatpush.msra.mxu0 0.0
    %1304 = vmatpush.msra.mxu0 0.0
    %1305 = vmatpush.msra.mxu0 0.0
    %1306 = vmatpush.msra.mxu0 0.0
    %1307 = vmatpush.msra.mxu0 0.0
    %1308 = vmatpush.msra.mxu0 0.0
    %1309 = vmatpush.msra.mxu0 %v1283
    %1310 = vmatpush.msra.mxu0 %v1282
    %1311 = vmatpush.msra.mxu0 %v1281
    %1312 = vmatmul.f32.gmra.mxu0 %v1294
    %v1313 = vpop.f32.mrf.mxu0
    %v1314 = vadd.f32 %v1291, %v1313
    %1315 = vdwg.mxu0
    %v1316 = vmul.f32 %v1314, 0.5
    %v1317 = vmul.f32 %v1314, 0.70710677
    %v1318 = vand.u32 2147483647, %v1317
    %v1319 = vmul.f32 %v1318, 0.3275911
    %v1320 = vadd.f32 %v1319, 1.0
    %v1321 = vrcp.pop %v1320
    %v1322 = vmul.f32 %v1320, %v1321
    %v1323 = vsub.f32 1.0, %v1322
    %v1324 = vmul.f32 %v1321, %v1323
    %v1325 = vadd.f32 %v1321, %v1324
    %vm1326 = vweird.f32 %v1320
    %vm1327 = vweird.f32 %v1321
    %vm1328 = vmor %vm1326, %vm1327
    %v1329 = vsel %vm1328, %v1321, %v1325
    %v1330 = vand.u32 2147483647, %v1320
    %vm1331 = vcmp.eq.f32.partialorder %v1330, 8.507059e+37
    %v1332 = vand.u32 %v1320, 2147483648
    %v1333 = vor.u32 1.1754944e-38, %v1332
    %v1334 = vsel %vm1331, %v1333, %v1329
    %v1335 = vmul.f32 1.0, %v1334
    %v1336 = vmul.f32 %v1335, 1.0614054
    %v1337 = vadd.f32 %v1336, -1.4531521
    %v1338 = vmul.f32 %v1337, %v1335
    %v1339 = vadd.f32 %v1338, 1.4214138
    %v1340 = vmul.f32 %v1339, %v1335
    %v1341 = vadd.f32 %v1340, -0.28449672
    %v1342 = vmul.f32 %v1341, %v1335
    %v1343 = vadd.f32 %v1342, 0.2548296
    %v1344 = vmul.f32 %v1343, %v1335
    %v1345 = vsub.f32 0.0, %v1318
    %v1346 = vmul.f32 %v1345, %v1318
    %v1347 = vmul.f32 %v1346, 1.442695
    %v1348 = vpow.pop %v1347
    %v1349 = vmul.f32 %v1344, %v1348
    %v1350 = vsub.f32 1.0, %v1349
    %vm1351 = vcmp.ge.f32.partialorder %v1317, 0.0
    %v1352 = vsub.f32 0.0, %v1350
    %v1353 = vsel %vm1351, %v1350, %v1352
    %v1354 = vadd.f32 %v1353, 1.0
    %v1355 = vmul.f32 %v1316, %v1354
    %v1356 = vld [vmem:[#allocation8 + $0x10] sm:$0xff]
    %v1357 = vld [vmem:[#allocation8 + $0x18] sm:$0xff]
    %v1358 = vld [vmem:[#allocation8 + $0x30] sm:$0xff]
    %v1359 = vld [vmem:[#allocation8 + $0x38] sm:$0xff]
    %v1360 = vld [vmem:[#allocation8 + $0x50] sm:$0xff]
    %v1361 = vld [vmem:[#allocation8 + $0x58] sm:$0xff]
    %v1362 = vld [vmem:[#allocation8 + $0x70] sm:$0xff]
    %v1363 = vld [vmem:[#allocation8 + $0x78] sm:$0xff]
    %v1364 = vld [vmem:[#allocation8 + $0x90] sm:$0xff]
    %v1365 = vld [vmem:[#allocation8 + $0x98] sm:$0xff]
    %v1366 = vld [vmem:[#allocation8 + $0xb0] sm:$0xff]
    %v1367 = vld [vmem:[#allocation8 + $0xb8] sm:$0xff]
    %v1368 = vld [vmem:[#allocation10 + $0xe] sm:$0x3]
    %v1370 = vperm.slane %v1368, 0
    %v1371 = vperm.slane %v1368, 1
    %1384 = vrot.lane.b32.xlu0 %v1356, 120
    %v1385 = vpop.permute.xlu0 %1384
    %1386 = vrot.lane.b32.xlu0 %v1357, 120
    %v1387 = vpop.permute.xlu0 %1386
    %1388 = vrot.lane.b32.xlu0 %v1358, 120
    %v1389 = vpop.permute.xlu0 %1388
    %1390 = vrot.lane.b32.xlu0 %v1359, 120
    %v1391 = vpop.permute.xlu0 %1390
    %1392 = vrot.lane.b32.xlu0 %v1360, 120
    %v1393 = vpop.permute.xlu0 %1392
    %1394 = vrot.lane.b32.xlu0 %v1361, 120
    %v1395 = vpop.permute.xlu0 %1394
    %1396 = vrot.lane.b32.xlu0 %v1362, 120
    %v1397 = vpop.permute.xlu0 %1396
    %1398 = vrot.lane.b32.xlu0 %v1363, 120
    %v1399 = vpop.permute.xlu0 %1398
    %1400 = vrot.lane.b32.xlu0 %v1364, 120
    %v1401 = vpop.permute.xlu0 %1400
    %1402 = vrot.lane.b32.xlu0 %v1365, 120
    %v1403 = vpop.permute.xlu0 %1402
    %1404 = vrot.lane.b32.xlu0 %v1366, 120
    %v1405 = vpop.permute.xlu0 %1404
    %1406 = vrot.lane.b32.xlu0 %v1367, 120
    %v1407 = vpop.permute.xlu0 %1406
    %vm1408 = vcmask 982016
    %v1409 = vsel %vm1408, %v1385, %v1387
    %v1410 = vsel %vm1408, %v1389, %v1391
    %v1411 = vsel %vm1408, %v1393, %v1395
    %v1412 = vsel %vm1408, %v1397, %v1399
    %v1413 = vsel %vm1408, %v1401, %v1403
    %v1414 = vsel %vm1408, %v1405, %v1407
    %1421 = vrot.lane.b32.xlu0 %v1370, 120
    %v1422 = vpop.permute.xlu0 %1421
    %1423 = vrot.lane.b32.xlu0 %v1371, 120
    %v1424 = vpop.permute.xlu0 %1423
    %v1425 = vsel %vm1408, %v1422, %v1424
    %v1428 = vsel %vm982, %v1355, 0
    %1430 = vmatpush.msra.mxu0 0.0
    %1431 = vmatpush.msra.mxu0 0.0
    %1432 = vmatpush.msra.mxu0 0.0
    %1433 = vmatpush.msra.mxu0 0.0
    %1434 = vmatpush.msra.mxu0 0.0
    %1435 = vmatpush.msra.mxu0 0.0
    %1436 = vmatpush.msra.mxu0 0.0
    %1437 = vmatpush.msra.mxu0 0.0
    %1438 = vmatpush.msra.mxu0 0.0
    %1439 = vmatpush.msra.mxu0 0.0
    %1440 = vmatpush.msra.mxu0 %v1414
    %1441 = vmatpush.msra.mxu0 %v1413
    %1442 = vmatpush.msra.mxu0 %v1412
    %1443 = vmatpush.msra.mxu0 %v1411
    %1444 = vmatpush.msra.mxu0 %v1410
    %1445 = vmatpush.msra.mxu0 %v1409
    %1446 = vmatmul.f32.gmra.mxu0 %v1428
    %v1447 = vpop.f32.mrf.mxu0
    %v1448 = vadd.f32 %v1425, %v1447
    %1449 = vdwg.mxu0
    %v1450 = vmul.f32 %v1448, 0.5
    %v1451 = vmul.f32 %v1450, 1.442695
    %v1452 = vpow.pop %v1451
    %1454 = vrot.lane.b32.xlu0 %v1452, 92
    %v1455 = vpop.permute.xlu0 %1454
    %v1457 = vmul.f32 %v94, %v1455
    %1459 = vrot.lane.b32.xlu0 %v1448, 28
    %v1460 = vpop.permute.xlu0 %1459
    %v1462 = vadd.f32 %v1457, %v1460
    %1464 = vrot.lane.b32.xlu0 %v1462, 100
    %v1465 = vpop.permute.xlu0 %1464
    %1467 = vst.msk [vmem:[#allocation11] sm:$0xff] %vm107, %v1465
    // Predicated region
    $region42: #{fcvae_forward.1} parent=1 // pred_check
      _
    $region43: #{fcvae_forward.1} parent=1 // pred_check_branch
      %1469 = sbr.rel (0) target = $region45
    $region44: #{fcvae_forward.1} parent=1 // pred_region
      %1471 = vsyncadd [#allocation4], 0
      %s1473 = sshll.u32 [#allocation11], 4
      %s1474 = int_to_ptr.vmem [resolvable:$true] %s1473
      %s1475 = sshll.u32 %s5, 4
      %s1476 = int_to_ptr.hbm [resolvable:$true] %s1475
      %1478 = dma.vmem_to_hbm [thread:$0]  %s1474, 128, %s1476, [#allocation4]
    $region45: #{fcvae_forward.1} parent=1 // pred_fallthru
      _
    // Predicated region
    $region46: #{fcvae_forward.1} parent=1 // pred_check
      _
    $region47: #{fcvae_forward.1} parent=1 // pred_check_branch
      %1480 = sbr.rel (0) target = $region49
    $region48: #{fcvae_forward.1} parent=1 // pred_region
      %1482 = dma.done [#allocation4], 128
    $region49: #{fcvae_forward.1} parent=1 // pred_fallthru
      _
    %1483 = vsyncpa [#allocation3], 1
    %1484 = vsyncpa [#allocation6], 1
    %1485 = vsyncpa [#allocation9], 1
    %1486 = vsyncpa [#allocation4], 1

</llo_original>
